<compile_context>
chip_gen: v7x
topology: tpu7x:2x2x1
jax: 0.10.0
libtpu: 0.0.40
codegen_flags: <defaults>
</compile_context>

<pallas_src>
import functools

import jax
import jax.numpy as jnp
import numpy as np
from jax.experimental import pallas as pl
from jax.experimental.pallas import tpu as pltpu

EPS = 1e-5  # PyTorch GroupNorm default eps.


def projection_head_kernel(x_ref, w1_ref, p1_ref, g1_ref, b1_ref,
                           w2f_ref, p2_ref, g2_ref, b2_ref, o_ref):
    # ---- Linear 1 (bf16 operands, f32 accumulation on the MXU) ----
    x = x_ref[...]                                                    # (TM, D_in) f32
    h = jnp.dot(x.astype(jnp.bfloat16), w1_ref[...],
                preferred_element_type=jnp.float32)                   # (TM, D_h) f32

    # ---- GroupNorm 1 (stats in f32 via block-diagonal averaging matrix P1) ----
    mean_h = jnp.dot(h, p1_ref[...], preferred_element_type=jnp.float32)
    ex2_h = jnp.dot(h * h, p1_ref[...], preferred_element_type=jnp.float32)
    var_h = jnp.maximum(ex2_h - mean_h * mean_h, 0.0)  # clamp: one-pass form
    h = (h - mean_h) * jax.lax.rsqrt(var_h + EPS) * g1_ref[...] + b1_ref[...]

    # ---- ReLU ----
    h = jnp.maximum(h, 0.0)

    # ---- Linear 2 fused with GroupNorm-2 mean:  h @ [W2 | W2@P2] ----
    d_out = o_ref.shape[-1]
    zm = jnp.dot(h.astype(jnp.bfloat16), w2f_ref[...],
                 preferred_element_type=jnp.float32)                  # (TM, 2*D_out)
    z = zm[:, :d_out]                                                 # lane-aligned split
    mean_z = zm[:, d_out:]

    # ---- GroupNorm 2 ----
    ex2_z = jnp.dot(z * z, p2_ref[...], preferred_element_type=jnp.float32)
    var_z = jnp.maximum(ex2_z - mean_z * mean_z, 0.0)
    z = (z - mean_z) * jax.lax.rsqrt(var_z + EPS) * g2_ref[...] + b2_ref[...]

    o_ref[...] = z.astype(o_ref.dtype)


def _resident_spec(shape):
    """Full-array block whose index_map ignores the grid step (stays in VMEM)."""
    ndim = len(shape)
    # TODO(synk): at real SwAV dims add pipeline_mode=pl.Buffered(1) to
    # single-buffer these never-changing blocks (halves resident VMEM);
    # irrelevant at the C=128 test shapes.
    return pl.BlockSpec(shape, lambda i, _n=ndim: (0,) * _n)


def _round_up(v, m):
    return ((v + m - 1) // m) * m


def _avg_matrix(channels, num_groups):
    """Block-diagonal (C, C) matrix: P[i, j] = 1/cpg if i, j in the same group,
    so h @ P == per-group mean of h broadcast back to all channels."""
    cpg = channels // num_groups
    grp = jnp.arange(channels) // cpg
    same = (grp[:, None] == grp[None, :]).astype(jnp.float32)
    return same / float(cpg)


@functools.partial(jax.jit, static_argnames=("num_groups", "tm"))
def custom_projection_head(x, w1_t, g1, b1, w2_t, g2, b2, *, num_groups, tm=256):
    """x: (B, D_in). w1_t/w2_t are nn.Linear weights stored transposed
    (in_features, out_features). g*/b* are GroupNorm affine params (C,)."""
    B, D_in = x.shape
    D_h = w1_t.shape[1]
    D_out = w2_t.shape[1]
    assert D_h % num_groups == 0 and D_out % num_groups == 0

    # Batch tile: multiple of 8 (sublane). Cap so the grid has >= 2 steps
    # whenever B allows it -> the "parallel" batch axis shards across v7x's
    # two TensorCores (grid of length 1 serializes on one TC). On single-TC
    # v5e/v6e a larger tm (e.g. 512) cuts per-step overhead - sweep there.
    tm = max(8, min(tm, _round_up(B, 8), _round_up(pl.cdiv(B, 2), 8)))
    B_pad = _round_up(B, tm)
    if B_pad != B:
        # Padded rows flow through GroupNorm (their output is just beta); they
        # are sliced off below - do not reuse the padded output.
        x = jnp.pad(x, ((0, B_pad - B), (0, 0)))

    # Block-diagonal group-averaging matrices (built under jit, one dispatch).
    # TODO(synk): at real SwAV dims (C=2048) switch the stats to (C,G)/(G,C)
    # group-sum + broadcast matmuls - the dense P is O(C^2) in VMEM and flops.
    P1 = _avg_matrix(D_h, num_groups)       # (D_h, D_h)   f32
    P2 = _avg_matrix(D_out, num_groups)     # (D_out, D_out) f32

    # Fold GroupNorm-2's mean into Linear-2:  h @ [W2 | W2@P2] -> [z | mean_z].
    w2f = jnp.concatenate([w2_t, w2_t @ P2], axis=1)       # (D_h, 2*D_out)

    # bf16 weights at the MXU boundary (halves weight DMA); GN stats stay f32.
    w1_b = w1_t.astype(jnp.bfloat16)
    w2f_b = w2f.astype(jnp.bfloat16)

    # GroupNorm affine params pre-shaped (1, C): lane-major, no in-kernel relayout.
    g1r = g1.reshape(1, D_h).astype(jnp.float32)
    b1r = b1.reshape(1, D_h).astype(jnp.float32)
    g2r = g2.reshape(1, D_out).astype(jnp.float32)
    b2r = b2.reshape(1, D_out).astype(jnp.float32)

    grid = (B_pad // tm,)

    in_specs = [
        pl.BlockSpec((tm, D_in), lambda i: (i, 0)),   # x: tiled over batch
        _resident_spec((D_in, D_h)),                  # W1 (bf16)
        _resident_spec((D_h, D_h)),                   # P1
        _resident_spec((1, D_h)),                     # gamma1
        _resident_spec((1, D_h)),                     # beta1
        _resident_spec((D_h, 2 * D_out)),             # [W2 | W2@P2] (bf16)
        _resident_spec((D_out, D_out)),               # P2
        _resident_spec((1, D_out)),                   # gamma2
        _resident_spec((1, D_out)),                   # beta2
    ]
    out_spec = pl.BlockSpec((tm, D_out), lambda i: (i, 0))

    out = pl.pallas_call(
        projection_head_kernel,
        out_shape=jax.ShapeDtypeStruct((B_pad, D_out), jnp.float32),
        grid_spec=pltpu.PrefetchScalarGridSpec(
            num_scalar_prefetch=0,
            grid=grid,
            in_specs=in_specs,
            out_specs=out_spec,
        ),
        compiler_params=pltpu.CompilerParams(
            dimension_semantics=("parallel",)),       # shard batch across TCs (v7x)
    )(x, w1_b, P1, g1r, b1r, w2f_b, P2, g2r, b2r)

    return out[:B]


def reference_forward(x, w1_t, g1, b1, w2_t, g2, b2, *, num_groups):
    """Pure-JAX f32 reference replicating the PyTorch module semantics."""
    def gn(h, gamma, beta):
        B, C = h.shape
        hg = h.reshape(B, num_groups, C // num_groups)
        mean = hg.mean(axis=-1, keepdims=True)
        var = hg.var(axis=-1, keepdims=True)  # biased, like PyTorch
        hn = ((hg - mean) / jnp.sqrt(var + EPS)).reshape(B, C)
        return hn * gamma[None, :] + beta[None, :]

    h = x @ w1_t
    h = jnp.maximum(gn(h, g1, b1), 0.0)
    z = h @ w2_t
    return gn(z, g2, b2)


if __name__ == "__main__":
    # Small shapes consistent with the module's forward (x is (batch, input_dim)),
    # chosen so the batch tiling runs 2 grid steps at TM=256 and every channel
    # dim is a multiple of 128.
    B, D_IN, D_H, D_OUT, G = 512, 256, 128, 128, 16

    key = jax.random.PRNGKey(0)
    kx, kw1, kw2, kg1, kb1, kg2, kb2 = jax.random.split(key, 7)

    x = jax.random.normal(kx, (B, D_IN), dtype=jnp.float32)
    # nn.Linear weights (out, in) stored transposed as (in, out).
    w1_t = jax.random.normal(kw1, (D_IN, D_H), dtype=jnp.float32) / jnp.sqrt(D_IN)
    w2_t = jax.random.normal(kw2, (D_H, D_OUT), dtype=jnp.float32) / jnp.sqrt(D_H)
    # GroupNorm affine params (deterministic, non-trivial).
    g1 = 1.0 + 0.1 * jax.random.normal(kg1, (D_H,), dtype=jnp.float32)
    b1 = 0.1 * jax.random.normal(kb1, (D_H,), dtype=jnp.float32)
    g2 = 1.0 + 0.1 * jax.random.normal(kg2, (D_OUT,), dtype=jnp.float32)
    b2 = 0.1 * jax.random.normal(kb2, (D_OUT,), dtype=jnp.float32)

    out = custom_projection_head(x, w1_t, g1, b1, w2_t, g2, b2,
                                 num_groups=G, tm=256)
    out = jax.block_until_ready(out)

    ref = reference_forward(x, w1_t, g1, b1, w2_t, g2, b2, num_groups=G)
    out_np = np.asarray(out)
    ref_np = np.asarray(jax.block_until_ready(ref))

    # The Linear matmuls now use bf16 operands (f32 accumulation) on the MXU,
    # so the tolerance vs the all-f32 reference is relaxed explicitly
    # (the all-f32 kernel variant met 2e-4). Also check the aggregate error.
    np.testing.assert_allclose(out_np, ref_np, atol=1e-1, rtol=1e-1)
    mae = float(np.mean(np.abs(out_np - ref_np)))
    assert mae < 2e-2, f"mean abs error too high: {mae}"

    print("KERNEL_OK")
</pallas_src>

<mosaic_0001>
module attributes {stable_mosaic.version = 11 : i64} {
  func.func @projection_head_kernel(%arg0: i32, %arg1: memref<256x256xf32, #tpu.memory_space<vmem>>, %arg2: memref<256x128xbf16, #tpu.memory_space<vmem>>, %arg3: memref<128x128xf32, #tpu.memory_space<vmem>>, %arg4: memref<1x128xf32, #tpu.memory_space<vmem>>, %arg5: memref<1x128xf32, #tpu.memory_space<vmem>>, %arg6: memref<128x256xbf16, #tpu.memory_space<vmem>>, %arg7: memref<128x128xf32, #tpu.memory_space<vmem>>, %arg8: memref<1x128xf32, #tpu.memory_space<vmem>>, %arg9: memref<1x128xf32, #tpu.memory_space<vmem>>, %arg10: memref<256x128xf32, #tpu.memory_space<vmem>>) attributes {dimension_semantics = [#tpu.dimension_semantics<parallel>], iteration_bounds = array<i64: 2>, scalar_prefetch = 0 : i64, scratch_operands = 0 : i64, tpu.core_type = #tpu.core_type<tc>, window_params = [{transform_indices = @transform_0, window_bounds = array<i64: 256, 256>}, {pipeline_mode = #tpu.pipeline_mode<synchronous>, transform_indices = @transform_1, window_bounds = array<i64: 256, 128>}, {pipeline_mode = #tpu.pipeline_mode<synchronous>, transform_indices = @transform_2, window_bounds = array<i64: 128, 128>}, {pipeline_mode = #tpu.pipeline_mode<synchronous>, transform_indices = @transform_3, window_bounds = array<i64: 1, 128>}, {pipeline_mode = #tpu.pipeline_mode<synchronous>, transform_indices = @transform_4, window_bounds = array<i64: 1, 128>}, {pipeline_mode = #tpu.pipeline_mode<synchronous>, transform_indices = @transform_5, window_bounds = array<i64: 128, 256>}, {pipeline_mode = #tpu.pipeline_mode<synchronous>, transform_indices = @transform_6, window_bounds = array<i64: 128, 128>}, {pipeline_mode = #tpu.pipeline_mode<synchronous>, transform_indices = @transform_7, window_bounds = array<i64: 1, 128>}, {pipeline_mode = #tpu.pipeline_mode<synchronous>, transform_indices = @transform_8, window_bounds = array<i64: 1, 128>}, {transform_indices = @transform_9, window_bounds = array<i64: 256, 128>}]} {
    %c0 = arith.constant 0 : index
    %c0_0 = arith.constant 0 : index
    %0 = vector.load %arg1[%c0, %c0_0] : memref<256x256xf32, #tpu.memory_space<vmem>>, vector<256x256xf32>
    %1 = arith.truncf %0 : vector<256x256xf32> to vector<256x256xbf16>
    %c0_1 = arith.constant 0 : index
    %c0_2 = arith.constant 0 : index
    %2 = vector.load %arg2[%c0_1, %c0_2] : memref<256x128xbf16, #tpu.memory_space<vmem>>, vector<256x128xbf16>
    %cst = arith.constant dense<0.000000e+00> : vector<256x128xf32>
    %3 = tpu.matmul %1, %2, %cst {dimension_numbers = #tpu.dot_dimension_numbers<[1], [0], [0], [1], [0, 0, 1, 1], [], []>} : vector<256x256xbf16>, vector<256x128xbf16>, vector<256x128xf32> -> vector<256x128xf32>
    %c0_3 = arith.constant 0 : index
    %c0_4 = arith.constant 0 : index
    %4 = vector.load %arg3[%c0_3, %c0_4] : memref<128x128xf32, #tpu.memory_space<vmem>>, vector<128x128xf32>
    %cst_5 = arith.constant dense<0.000000e+00> : vector<256x128xf32>
    %5 = tpu.matmul %3, %4, %cst_5 {dimension_numbers = #tpu.dot_dimension_numbers<[1], [0], [0], [1], [0, 0, 1, 1], [], []>} : vector<256x128xf32>, vector<128x128xf32>, vector<256x128xf32> -> vector<256x128xf32>
    %6 = arith.mulf %3, %3 : vector<256x128xf32>
    %c0_6 = arith.constant 0 : index
    %c0_7 = arith.constant 0 : index
    %7 = vector.load %arg3[%c0_6, %c0_7] : memref<128x128xf32, #tpu.memory_space<vmem>>, vector<128x128xf32>
    %cst_8 = arith.constant dense<0.000000e+00> : vector<256x128xf32>
    %8 = tpu.matmul %6, %7, %cst_8 {dimension_numbers = #tpu.dot_dimension_numbers<[1], [0], [0], [1], [0, 0, 1, 1], [], []>} : vector<256x128xf32>, vector<128x128xf32>, vector<256x128xf32> -> vector<256x128xf32>
    %9 = arith.mulf %5, %5 : vector<256x128xf32>
    %10 = arith.subf %8, %9 : vector<256x128xf32>
    %cst_9 = arith.constant 0.000000e+00 : f32
    %11 = vector.broadcast %cst_9 : f32 to vector<256x128xf32>
    %12 = arith.maximumf %10, %11 : vector<256x128xf32>
    %13 = arith.subf %3, %5 : vector<256x128xf32>
    %cst_10 = arith.constant 9.99999974E-6 : f32
    %14 = vector.broadcast %cst_10 : f32 to vector<256x128xf32>
    %15 = arith.addf %12, %14 : vector<256x128xf32>
    %16 = math.rsqrt %15 : vector<256x128xf32>
    %17 = arith.mulf %13, %16 : vector<256x128xf32>
    %c0_11 = arith.constant 0 : index
    %c0_12 = arith.constant 0 : index
    %18 = vector.load %arg4[%c0_11, %c0_12] : memref<1x128xf32, #tpu.memory_space<vmem>>, vector<1x128xf32>
    %19 = vector.broadcast %18 : vector<1x128xf32> to vector<256x128xf32>
    %20 = arith.mulf %17, %19 : vector<256x128xf32>
    %c0_13 = arith.constant 0 : index
    %c0_14 = arith.constant 0 : index
    %21 = vector.load %arg5[%c0_13, %c0_14] : memref<1x128xf32, #tpu.memory_space<vmem>>, vector<1x128xf32>
    %22 = vector.broadcast %21 : vector<1x128xf32> to vector<256x128xf32>
    %23 = arith.addf %20, %22 : vector<256x128xf32>
    %cst_15 = arith.constant 0.000000e+00 : f32
    %24 = vector.broadcast %cst_15 : f32 to vector<256x128xf32>
    %25 = arith.maximumf %23, %24 : vector<256x128xf32>
    %26 = arith.truncf %25 : vector<256x128xf32> to vector<256x128xbf16>
    %c0_16 = arith.constant 0 : index
    %c0_17 = arith.constant 0 : index
    %27 = vector.load %arg6[%c0_16, %c0_17] : memref<128x256xbf16, #tpu.memory_space<vmem>>, vector<128x256xbf16>
    %cst_18 = arith.constant dense<0.000000e+00> : vector<256x256xf32>
    %28 = tpu.matmul %26, %27, %cst_18 {dimension_numbers = #tpu.dot_dimension_numbers<[1], [0], [0], [1], [0, 0, 1, 1], [], []>} : vector<256x128xbf16>, vector<128x256xbf16>, vector<256x256xf32> -> vector<256x256xf32>
    %29 = vector.extract_strided_slice %28 {offsets = [0, 0], sizes = [256, 128], strides = [1, 1]} : vector<256x256xf32> to vector<256x128xf32>
    %30 = vector.extract_strided_slice %28 {offsets = [0, 128], sizes = [256, 128], strides = [1, 1]} : vector<256x256xf32> to vector<256x128xf32>
    %31 = arith.mulf %29, %29 : vector<256x128xf32>
    %c0_19 = arith.constant 0 : index
    %c0_20 = arith.constant 0 : index
    %32 = vector.load %arg7[%c0_19, %c0_20] : memref<128x128xf32, #tpu.memory_space<vmem>>, vector<128x128xf32>
    %cst_21 = arith.constant dense<0.000000e+00> : vector<256x128xf32>
    %33 = tpu.matmul %31, %32, %cst_21 {dimension_numbers = #tpu.dot_dimension_numbers<[1], [0], [0], [1], [0, 0, 1, 1], [], []>} : vector<256x128xf32>, vector<128x128xf32>, vector<256x128xf32> -> vector<256x128xf32>
    %34 = arith.mulf %30, %30 : vector<256x128xf32>
    %35 = arith.subf %33, %34 : vector<256x128xf32>
    %cst_22 = arith.constant 0.000000e+00 : f32
    %36 = vector.broadcast %cst_22 : f32 to vector<256x128xf32>
    %37 = arith.maximumf %35, %36 : vector<256x128xf32>
    %38 = arith.subf %29, %30 : vector<256x128xf32>
    %cst_23 = arith.constant 9.99999974E-6 : f32
    %39 = vector.broadcast %cst_23 : f32 to vector<256x128xf32>
    %40 = arith.addf %37, %39 : vector<256x128xf32>
    %41 = math.rsqrt %40 : vector<256x128xf32>
    %42 = arith.mulf %38, %41 : vector<256x128xf32>
    %c0_24 = arith.constant 0 : index
    %c0_25 = arith.constant 0 : index
    %43 = vector.load %arg8[%c0_24, %c0_25] : memref<1x128xf32, #tpu.memory_space<vmem>>, vector<1x128xf32>
    %44 = vector.broadcast %43 : vector<1x128xf32> to vector<256x128xf32>
    %45 = arith.mulf %42, %44 : vector<256x128xf32>
    %c0_26 = arith.constant 0 : index
    %c0_27 = arith.constant 0 : index
    %46 = vector.load %arg9[%c0_26, %c0_27] : memref<1x128xf32, #tpu.memory_space<vmem>>, vector<1x128xf32>
    %47 = vector.broadcast %46 : vector<1x128xf32> to vector<256x128xf32>
    %48 = arith.addf %45, %47 : vector<256x128xf32>
    %c0_28 = arith.constant 0 : index
    %c0_29 = arith.constant 0 : index
    %49 = vector.load %arg10[%c0_28, %c0_29] : memref<256x128xf32, #tpu.memory_space<vmem>>, vector<256x128xf32>
    tpu.vector_store %arg10[%c0_28, %c0_29], %48 {strides = array<i32>} : memref<256x128xf32, #tpu.memory_space<vmem>>, vector<256x128xf32>,
    return
  }
  func.func @transform_0(%arg0: i32) -> (i32, i32) {
    %c0_i32 = arith.constant 0 : i32
    %c0_i32_0 = arith.constant 0 : i32
    return %arg0, %c0_i32 : i32, i32
  }
  func.func @transform_1(%arg0: i32) -> (i32, i32) {
    %c0_i32 = arith.constant 0 : i32
    %c0_i32_0 = arith.constant 0 : i32
    %c0_i32_1 = arith.constant 0 : i32
    return %c0_i32, %c0_i32_0 : i32, i32
  }
  func.func @transform_2(%arg0: i32) -> (i32, i32) {
    %c0_i32 = arith.constant 0 : i32
    %c0_i32_0 = arith.constant 0 : i32
    %c0_i32_1 = arith.constant 0 : i32
    return %c0_i32, %c0_i32_0 : i32, i32
  }
  func.func @transform_3(%arg0: i32) -> (i32, i32) {
    %c0_i32 = arith.constant 0 : i32
    %c0_i32_0 = arith.constant 0 : i32
    %c0_i32_1 = arith.constant 0 : i32
    return %c0_i32, %c0_i32_0 : i32, i32
  }
  func.func @transform_4(%arg0: i32) -> (i32, i32) {
    %c0_i32 = arith.constant 0 : i32
    %c0_i32_0 = arith.constant 0 : i32
    %c0_i32_1 = arith.constant 0 : i32
    return %c0_i32, %c0_i32_0 : i32, i32
  }
  func.func @transform_5(%arg0: i32) -> (i32, i32) {
    %c0_i32 = arith.constant 0 : i32
    %c0_i32_0 = arith.constant 0 : i32
    %c0_i32_1 = arith.constant 0 : i32
    return %c0_i32, %c0_i32_0 : i32, i32
  }
  func.func @transform_6(%arg0: i32) -> (i32, i32) {
    %c0_i32 = arith.constant 0 : i32
    %c0_i32_0 = arith.constant 0 : i32
    %c0_i32_1 = arith.constant 0 : i32
    return %c0_i32, %c0_i32_0 : i32, i32
  }
  func.func @transform_7(%arg0: i32) -> (i32, i32) {
    %c0_i32 = arith.constant 0 : i32
    %c0_i32_0 = arith.constant 0 : i32
    %c0_i32_1 = arith.constant 0 : i32
    return %c0_i32, %c0_i32_0 : i32, i32
  }
  func.func @transform_8(%arg0: i32) -> (i32, i32) {
    %c0_i32 = arith.constant 0 : i32
    %c0_i32_0 = arith.constant 0 : i32
    %c0_i32_1 = arith.constant 0 : i32
    return %c0_i32, %c0_i32_0 : i32, i32
  }
  func.func @transform_9(%arg0: i32) -> (i32, i32) {
    %c0_i32 = arith.constant 0 : i32
    %c0_i32_0 = arith.constant 0 : i32
    return %arg0, %c0_i32 : i32, i32
  }
}

</mosaic_0001>

<llo_original>
// kernel: custom_projection_head.1
$region0: #{custom_projection_head.1}
  #allocation0 [shape = 'u32[]', space=smem, size = 0x4, offset = 0x4, fixed_abs, tag = 'smem constant byte address 0x4 - core index']
  #allocation1 [shape = 'u32[144,128]{1,0:T(1,128)}', space=vmem, size = 0x12000, scoped, tag = 'internal scratch']
  %s0 = inlined_call_operand.vmem [shape: f32[512,256], index: 0, kind: input, shape index: {}]
  %s1 = inlined_call_operand.vmem [shape: bf16[256,128], index: 1, kind: input, shape index: {}]
  %s2 = inlined_call_operand.vmem [shape: f32[128,128], index: 2, kind: input, shape index: {}, may-alias: {2,6}]
  %s3 = inlined_call_operand.vmem [shape: f32[1,128], index: 3, kind: input, shape index: {}]
  %s4 = inlined_call_operand.vmem [shape: f32[1,128], index: 4, kind: input, shape index: {}]
  %s5 = inlined_call_operand.vmem [shape: bf16[128,256], index: 5, kind: input, shape index: {}]
  %s6 = inlined_call_operand.vmem [shape: f32[128,128], index: 6, kind: input, shape index: {}, may-alias: {2,6}]
  %s7 = inlined_call_operand.vmem [shape: f32[1,128], index: 7, kind: input, shape index: {}]
  %s8 = inlined_call_operand.vmem [shape: f32[1,128], index: 8, kind: input, shape index: {}]
  %s9 = inlined_call_operand.hbm [shape: f32[512,128], index: 9, kind: output, shape index: {}]
  %s10 = sld [smem:[#allocation0]]
  $region69: #{custom_projection_head.1} parent=0
    _
  %s12 = ssub.s32 1, %s10
  %s13 = scalar_select 0, %s12, %s10
  $region1: #{custom_projection_head.1} parent=0
    #allocation2 [shape = 'u8[262144]{0}', space=vmem, size = 0x40000, scoped, tag = 'output window, operand 0']
    #allocation3 [shape = 's32[2]{0}', space=sflag, size = 0x8, scoped, tag = 'scoped memory for custom_projection_head.1']
    %14 = vsyncpa [#allocation3], 0
    %s15 = scalar_lea.sflag [#allocation3], 1
    %16 = vsyncpa %s15, 0
    loop: start=0, step=1, limit=4
    $region2: #{custom_projection_head.1} parent=1 // loop_pre_header
      _
    $region3: #{custom_projection_head.1} parent=1 // loop_header
      %s18 = sphi 0, %s22
      %p19 = scmp.ge.s32.totalorder %s18, 4
      %s28 = sphi 0, %s30
      %s31 = sphi 0, %s28
      %s32 = sphi 0, %s31
      %s48 = sphi 0, %s32
      %s52 = sphi 0, %s52
      %s54 = sphi 0, %s52
      %s55 = sphi 0, %s54
      %s69 = sphi 0, %s55
      %s73 = sphi 0, %s73
      %s75 = sphi 0, %s73
      %s76 = sphi 0, %s75
      %s90 = sphi 0, %s76
      %s94 = sphi 0, %s94
      %s96 = sphi 0, %s94
      %s97 = sphi 0, %s96
      %s111 = sphi 0, %s97
      %s115 = sphi 0, %s115
      %s117 = sphi 0, %s115
      %s118 = sphi 0, %s117
      %s132 = sphi 0, %s118
      %s136 = sphi 0, %s136
      %s138 = sphi 0, %s136
      %s139 = sphi 0, %s138
      %s153 = sphi 0, %s139
      %s157 = sphi 0, %s157
      %s159 = sphi 0, %s157
      %s160 = sphi 0, %s159
      %s174 = sphi 0, %s160
      %s178 = sphi 0, %s178
      %s180 = sphi 0, %s178
      %s181 = sphi 0, %s180
      %s195 = sphi 0, %s181
      %s199 = sphi 0, %s199
      %s201 = sphi 0, %s199
      %s202 = sphi 0, %s201
      %s216 = sphi 0, %s202
      %s222 = sphi 0, %s224
      %s225 = sphi 0, %s222
      %s226 = sphi 0, %s225
      %s242 = sphi 0, %s226
    $region4: #{custom_projection_head.1} parent=1 // loop_header_branch
      %21 = sbr.rel (%p19) target = $region8
    $region5: #{custom_projection_head.1} parent=1 // loop_body
      %s23 = ssub.s32 %s18, 1
      %s24 = ssub.s32 %s18, 2
      %s25 = sadd.s32 %s18, 1
      %s26 = ssub.s32 %s18, %s25
      %p27 = scmp.eq.s32.totalorder %s26, 0
      %s29 = sadd.s32 %s28, 1
      %s30 = scalar_select %p27, %s28, %s29
      %p33 = pneg %p27
      %p34 = scmp.eq.s32.totalorder %s18, 1
      %p35 = por %p33, %p34
      %p36 = scmp.ne.s32.totalorder %s28, %s31
      %p37 = scmp.eq.s32.totalorder %s18, 0
      %p38 = por %p36, %p37
      %p39 = scmp.ne.s32.totalorder %s28, %s31
      %p40 = scmp.eq.s32.totalorder %s23, 1
      %p41 = por %p39, %p40
      %p42 = scmp.ne.s32.totalorder %s31, %s32
      %p43 = scmp.eq.s32.totalorder %s23, 0
      %p44 = por %p42, %p43
      %p45 = scmp.ne.s32.totalorder %s31, %s32
      %p46 = scmp.eq.s32.totalorder %s24, 1
      %p47 = por %p45, %p46
      %p49 = scmp.ne.s32.totalorder %s32, %s48
      %p50 = scmp.eq.s32.totalorder %s24, 0
      %p51 = por %p49, %p50
      %s53 = sadd.s32 %s52, 1
      %p56 = scmp.eq.s32.totalorder %s18, 1
      %p57 = scmp.ne.s32.totalorder %s52, %s54
      %p58 = scmp.eq.s32.totalorder %s18, 0
      %p59 = por %p57, %p58
      %p60 = scmp.ne.s32.totalorder %s52, %s54
      %p61 = scmp.eq.s32.totalorder %s23, 1
      %p62 = por %p60, %p61
      %p63 = scmp.ne.s32.totalorder %s54, %s55
      %p64 = scmp.eq.s32.totalorder %s23, 0
      %p65 = por %p63, %p64
      %p66 = scmp.ne.s32.totalorder %s54, %s55
      %p67 = scmp.eq.s32.totalorder %s24, 1
      %p68 = por %p66, %p67
      %p70 = scmp.ne.s32.totalorder %s55, %s69
      %p71 = scmp.eq.s32.totalorder %s24, 0
      %p72 = por %p70, %p71
      %s74 = sadd.s32 %s73, 1
      %p77 = scmp.eq.s32.totalorder %s18, 1
      %p78 = scmp.ne.s32.totalorder %s73, %s75
      %p79 = scmp.eq.s32.totalorder %s18, 0
      %p80 = por %p78, %p79
      %p81 = scmp.ne.s32.totalorder %s73, %s75
      %p82 = scmp.eq.s32.totalorder %s23, 1
      %p83 = por %p81, %p82
      %p84 = scmp.ne.s32.totalorder %s75, %s76
      %p85 = scmp.eq.s32.totalorder %s23, 0
      %p86 = por %p84, %p85
      %p87 = scmp.ne.s32.totalorder %s75, %s76
      %p88 = scmp.eq.s32.totalorder %s24, 1
      %p89 = por %p87, %p88
      %p91 = scmp.ne.s32.totalorder %s76, %s90
      %p92 = scmp.eq.s32.totalorder %s24, 0
      %p93 = por %p91, %p92
      %s95 = sadd.s32 %s94, 1
      %p98 = scmp.eq.s32.totalorder %s18, 1
      %p99 = scmp.ne.s32.totalorder %s94, %s96
      %p100 = scmp.eq.s32.totalorder %s18, 0
      %p101 = por %p99, %p100
      %p102 = scmp.ne.s32.totalorder %s94, %s96
      %p103 = scmp.eq.s32.totalorder %s23, 1
      %p104 = por %p102, %p103
      %p105 = scmp.ne.s32.totalorder %s96, %s97
      %p106 = scmp.eq.s32.totalorder %s23, 0
      %p107 = por %p105, %p106
      %p108 = scmp.ne.s32.totalorder %s96, %s97
      %p109 = scmp.eq.s32.totalorder %s24, 1
      %p110 = por %p108, %p109
      %p112 = scmp.ne.s32.totalorder %s97, %s111
      %p113 = scmp.eq.s32.totalorder %s24, 0
      %p114 = por %p112, %p113
      %s116 = sadd.s32 %s115, 1
      %p119 = scmp.eq.s32.totalorder %s18, 1
      %p120 = scmp.ne.s32.totalorder %s115, %s117
      %p121 = scmp.eq.s32.totalorder %s18, 0
      %p122 = por %p120, %p121
      %p123 = scmp.ne.s32.totalorder %s115, %s117
      %p124 = scmp.eq.s32.totalorder %s23, 1
      %p125 = por %p123, %p124
      %p126 = scmp.ne.s32.totalorder %s117, %s118
      %p127 = scmp.eq.s32.totalorder %s23, 0
      %p128 = por %p126, %p127
      %p129 = scmp.ne.s32.totalorder %s117, %s118
      %p130 = scmp.eq.s32.totalorder %s24, 1
      %p131 = por %p129, %p130
      %p133 = scmp.ne.s32.totalorder %s118, %s132
      %p134 = scmp.eq.s32.totalorder %s24, 0
      %p135 = por %p133, %p134
      %s137 = sadd.s32 %s136, 1
      %p140 = scmp.eq.s32.totalorder %s18, 1
      %p141 = scmp.ne.s32.totalorder %s136, %s138
      %p142 = scmp.eq.s32.totalorder %s18, 0
      %p143 = por %p141, %p142
      %p144 = scmp.ne.s32.totalorder %s136, %s138
      %p145 = scmp.eq.s32.totalorder %s23, 1
      %p146 = por %p144, %p145
      %p147 = scmp.ne.s32.totalorder %s138, %s139
      %p148 = scmp.eq.s32.totalorder %s23, 0
      %p149 = por %p147, %p148
      %p150 = scmp.ne.s32.totalorder %s138, %s139
      %p151 = scmp.eq.s32.totalorder %s24, 1
      %p152 = por %p150, %p151
      %p154 = scmp.ne.s32.totalorder %s139, %s153
      %p155 = scmp.eq.s32.totalorder %s24, 0
      %p156 = por %p154, %p155
      %s158 = sadd.s32 %s157, 1
      %p161 = scmp.eq.s32.totalorder %s18, 1
      %p162 = scmp.ne.s32.totalorder %s157, %s159
      %p163 = scmp.eq.s32.totalorder %s18, 0
      %p164 = por %p162, %p163
      %p165 = scmp.ne.s32.totalorder %s157, %s159
      %p166 = scmp.eq.s32.totalorder %s23, 1
      %p167 = por %p165, %p166
      %p168 = scmp.ne.s32.totalorder %s159, %s160
      %p169 = scmp.eq.s32.totalorder %s23, 0
      %p170 = por %p168, %p169
      %p171 = scmp.ne.s32.totalorder %s159, %s160
      %p172 = scmp.eq.s32.totalorder %s24, 1
      %p173 = por %p171, %p172
      %p175 = scmp.ne.s32.totalorder %s160, %s174
      %p176 = scmp.eq.s32.totalorder %s24, 0
      %p177 = por %p175, %p176
      %s179 = sadd.s32 %s178, 1
      %p182 = scmp.eq.s32.totalorder %s18, 1
      %p183 = scmp.ne.s32.totalorder %s178, %s180
      %p184 = scmp.eq.s32.totalorder %s18, 0
      %p185 = por %p183, %p184
      %p186 = scmp.ne.s32.totalorder %s178, %s180
      %p187 = scmp.eq.s32.totalorder %s23, 1
      %p188 = por %p186, %p187
      %p189 = scmp.ne.s32.totalorder %s180, %s181
      %p190 = scmp.eq.s32.totalorder %s23, 0
      %p191 = por %p189, %p190
      %p192 = scmp.ne.s32.totalorder %s180, %s181
      %p193 = scmp.eq.s32.totalorder %s24, 1
      %p194 = por %p192, %p193
      %p196 = scmp.ne.s32.totalorder %s181, %s195
      %p197 = scmp.eq.s32.totalorder %s24, 0
      %p198 = por %p196, %p197
      %s200 = sadd.s32 %s199, 1
      %p203 = scmp.eq.s32.totalorder %s18, 1
      %p204 = scmp.ne.s32.totalorder %s199, %s201
      %p205 = scmp.eq.s32.totalorder %s18, 0
      %p206 = por %p204, %p205
      %p207 = scmp.ne.s32.totalorder %s199, %s201
      %p208 = scmp.eq.s32.totalorder %s23, 1
      %p209 = por %p207, %p208
      %p210 = scmp.ne.s32.totalorder %s201, %s202
      %p211 = scmp.eq.s32.totalorder %s23, 0
      %p212 = por %p210, %p211
      %p213 = scmp.ne.s32.totalorder %s201, %s202
      %p214 = scmp.eq.s32.totalorder %s24, 1
      %p215 = por %p213, %p214
      %p217 = scmp.ne.s32.totalorder %s202, %s216
      %p218 = scmp.eq.s32.totalorder %s24, 0
      %p219 = por %p217, %p218
      %s220 = ssub.s32 %s18, %s25
      %p221 = scmp.eq.s32.totalorder %s220, 0
      %s223 = sadd.s32 %s222, 1
      %s224 = scalar_select %p221, %s222, %s223
      %p227 = pneg %p221
      %p228 = scmp.eq.s32.totalorder %s18, 1
      %p229 = por %p227, %p228
      %p230 = scmp.ne.s32.totalorder %s222, %s225
      %p231 = scmp.eq.s32.totalorder %s18, 0
      %p232 = por %p230, %p231
      %p233 = scmp.ne.s32.totalorder %s222, %s225
      %p234 = scmp.eq.s32.totalorder %s23, 1
      %p235 = por %p233, %p234
      %p236 = scmp.ne.s32.totalorder %s225, %s226
      %p237 = scmp.eq.s32.totalorder %s23, 0
      %p238 = por %p236, %p237
      %p239 = scmp.ne.s32.totalorder %s225, %s226
      %p240 = scmp.eq.s32.totalorder %s24, 1
      %p241 = por %p239, %p240
      %p243 = scmp.ne.s32.totalorder %s226, %s242
      %p244 = scmp.eq.s32.totalorder %s24, 0
      %p245 = por %p243, %p244
      %p246 = scmp.le.s32.totalorder 1, %s18
      %p247 = scmp.lt.s32.totalorder %s18, 3
      %p248 = pnand %p246, %p247
      %p249 = pneg %p248
      // Predicated region
      $region9: #{custom_projection_head.1} parent=5 // pred_check
        _
      $region10: #{custom_projection_head.1} parent=5 // pred_check_branch
        %251 = sbr.rel (%p248) target = $region12
      $region11: #{custom_projection_head.1} parent=5 // pred_region
        %s252 = ssub.s32 %s18, 1
        // Predicated region
        $region13: #{custom_projection_head.1} parent=11 // pred_check
          %p253 = pneg %p65
        $region14: #{custom_projection_head.1} parent=11 // pred_check_branch
          %255 = sbr.rel (%p253) target = $region16
        $region15: #{custom_projection_head.1} parent=11 // pred_region
          _
        $region16: #{custom_projection_head.1} parent=11 // pred_fallthru
          _
        // Predicated region
        $region17: #{custom_projection_head.1} parent=11 // pred_check
          %p256 = pneg %p86
        $region18: #{custom_projection_head.1} parent=11 // pred_check_branch
          %258 = sbr.rel (%p256) target = $region20
        $region19: #{custom_projection_head.1} parent=11 // pred_region
          _
        $region20: #{custom_projection_head.1} parent=11 // pred_fallthru
          _
        // Predicated region
        $region21: #{custom_projection_head.1} parent=11 // pred_check
          %p259 = pneg %p107
        $region22: #{custom_projection_head.1} parent=11 // pred_check_branch
          %261 = sbr.rel (%p259) target = $region24
        $region23: #{custom_projection_head.1} parent=11 // pred_region
          _
        $region24: #{custom_projection_head.1} parent=11 // pred_fallthru
          _
        // Predicated region
        $region25: #{custom_projection_head.1} parent=11 // pred_check
          %p262 = pneg %p128
        $region26: #{custom_projection_head.1} parent=11 // pred_check_branch
          %264 = sbr.rel (%p262) target = $region28
        $region27: #{custom_projection_head.1} parent=11 // pred_region
          _
        $region28: #{custom_projection_head.1} parent=11 // pred_fallthru
          _
        // Predicated region
        $region29: #{custom_projection_head.1} parent=11 // pred_check
          %p265 = pneg %p149
        $region30: #{custom_projection_head.1} parent=11 // pred_check_branch
          %267 = sbr.rel (%p265) target = $region32
        $region31: #{custom_projection_head.1} parent=11 // pred_region
          _
        $region32: #{custom_projection_head.1} parent=11 // pred_fallthru
          _
        // Predicated region
        $region33: #{custom_projection_head.1} parent=11 // pred_check
          %p268 = pneg %p170
        $region34: #{custom_projection_head.1} parent=11 // pred_check_branch
          %270 = sbr.rel (%p268) target = $region36
        $region35: #{custom_projection_head.1} parent=11 // pred_region
          _
        $region36: #{custom_projection_head.1} parent=11 // pred_fallthru
          _
        // Predicated region
        $region37: #{custom_projection_head.1} parent=11 // pred_check
          %p271 = pneg %p191
        $region38: #{custom_projection_head.1} parent=11 // pred_check_branch
          %273 = sbr.rel (%p271) target = $region40
        $region39: #{custom_projection_head.1} parent=11 // pred_region
          _
        $region40: #{custom_projection_head.1} parent=11 // pred_fallthru
          _
        // Predicated region
        $region41: #{custom_projection_head.1} parent=11 // pred_check
          %p274 = pneg %p212
        $region42: #{custom_projection_head.1} parent=11 // pred_check_branch
          %276 = sbr.rel (%p274) target = $region44
        $region43: #{custom_projection_head.1} parent=11 // pred_region
          _
        $region44: #{custom_projection_head.1} parent=11 // pred_fallthru
          _
      $region12: #{custom_projection_head.1} parent=5 // pred_fallthru
        _
      %p277 = scmp.lt.s32.totalorder %s18, 2
      // Predicated region
      $region45: #{custom_projection_head.1} parent=5 // pred_check
        %p278 = pneg %p277
      $region46: #{custom_projection_head.1} parent=5 // pred_check_branch
        %280 = sbr.rel (%p278) target = $region48
      $region47: #{custom_projection_head.1} parent=5 // pred_region
        // Predicated region
        $region49: #{custom_projection_head.1} parent=47 // pred_check
          %p281 = pneg %p38
        $region50: #{custom_projection_head.1} parent=47 // pred_check_branch
          %283 = sbr.rel (%p281) target = $region52
        $region51: #{custom_projection_head.1} parent=47 // pred_region
          %s284 = smul.u32 32, %s18
          %p285 = scmp.lt.s32.totalorder %s284, 63
          %s286 = scalar_select %p285, %s284, 63
          %s287 = smul.addr %s286, 2
          %s288 = smul.addr %s287, 8
          %s289 = scalar_lea.vmem %s0, %s288
          %s290 = smul.u32 32, %s18
        $region52: #{custom_projection_head.1} parent=47 // pred_fallthru
          _
      $region48: #{custom_projection_head.1} parent=5 // pred_fallthru
        _
      %p291 = scmp.le.s32.totalorder 1, %s18
      %p292 = scmp.lt.s32.totalorder %s18, 3
      %p293 = pnand %p291, %p292
      %p294 = pneg %p293
      // Predicated region
      $region53: #{custom_projection_head.1} parent=5 // pred_check
        _
      $region54: #{custom_projection_head.1} parent=5 // pred_check_branch
        %296 = sbr.rel (%p293) target = $region56
      $region55: #{custom_projection_head.1} parent=5 // pred_region
        %s297 = ssub.s32 %s18, 1
        %s298 = smul.u32 32, %s23
        %p299 = scmp.lt.s32.totalorder %s298, 63
        %s300 = scalar_select %p299, %s298, 63
        %s301 = smul.addr %s300, 2
        %s302 = smul.addr %s301, 8
        %s303 = scalar_lea.vmem %s0, %s302
        %p304 = pneg %p44
        %p305 = pneg %p41
        %p306 = pneg %p65
        %p307 = pneg %p62
        %p308 = pneg %p86
        %p309 = pneg %p83
        %p310 = pneg %p107
        %p311 = pneg %p104
        %p312 = pneg %p128
        %p313 = pneg %p125
        %p314 = pneg %p149
        %p315 = pneg %p146
        %p316 = pneg %p170
        %p317 = pneg %p167
        %p318 = pneg %p191
        %p319 = pneg %p188
        %p320 = pneg %p212
        %p321 = pneg %p209
        %p322 = pneg %p238
        %p323 = pneg %p235
        %s324 = sand.u32 %s225, 1
        %s325 = scalar_lea.sflag [#allocation3], %s324
        %s326 = sand.u32 %s225, 1
        %s327 = smul.addr %s326, 256
        %s328 = scalar_lea.vmem [#allocation2], %s327
        %s329 = smul.u32 32, %s23
        %p330 = scmp.lt.s32.totalorder %s329, 63
        %s331 = scalar_select %p330, %s329, 63
        %s332 = smul.addr %s331, 2
        %s333 = smul.addr %s332, 8
        %s334 = scalar_lea.vmem %s0, %s333
        %s335 = smul.u32 32, %s23
        %s336 = smul.u32 32, %s23
        %v338 = vld [vmem:[%s334] sm:$0xff]
        %v339 = vld [vmem:[%s334 + $0x8] sm:$0xff]
        %v340 = vld [vmem:[%s334 + $0x10] sm:$0xff]
        %v341 = vld [vmem:[%s334 + $0x18] sm:$0xff]
        %v342 = vld [vmem:[%s334 + $0x20] sm:$0xff]
        %v343 = vld [vmem:[%s334 + $0x28] sm:$0xff]
        %v344 = vld [vmem:[%s334 + $0x30] sm:$0xff]
        %v345 = vld [vmem:[%s334 + $0x38] sm:$0xff]
        %v346 = vld [vmem:[%s334 + $0x40] sm:$0xff]
        %v347 = vld [vmem:[%s334 + $0x48] sm:$0xff]
        %v348 = vld [vmem:[%s334 + $0x50] sm:$0xff]
        %v349 = vld [vmem:[%s334 + $0x58] sm:$0xff]
        %v350 = vld [vmem:[%s334 + $0x60] sm:$0xff]
        %v351 = vld [vmem:[%s334 + $0x68] sm:$0xff]
        %v352 = vld [vmem:[%s334 + $0x70] sm:$0xff]
        %v353 = vld [vmem:[%s334 + $0x78] sm:$0xff]
        %v354 = vld [vmem:[%s334 + $0x80] sm:$0xff]
        %v355 = vld [vmem:[%s334 + $0x88] sm:$0xff]
        %v356 = vld [vmem:[%s334 + $0x90] sm:$0xff]
        %v357 = vld [vmem:[%s334 + $0x98] sm:$0xff]
        %v358 = vld [vmem:[%s334 + $0xa0] sm:$0xff]
        %v359 = vld [vmem:[%s334 + $0xa8] sm:$0xff]
        %v360 = vld [vmem:[%s334 + $0xb0] sm:$0xff]
        %v361 = vld [vmem:[%s334 + $0xb8] sm:$0xff]
        %v362 = vld [vmem:[%s334 + $0xc0] sm:$0xff]
        %v363 = vld [vmem:[%s334 + $0xc8] sm:$0xff]
        %v364 = vld [vmem:[%s334 + $0xd0] sm:$0xff]
        %v365 = vld [vmem:[%s334 + $0xd8] sm:$0xff]
        %v366 = vld [vmem:[%s334 + $0xe0] sm:$0xff]
        %v367 = vld [vmem:[%s334 + $0xe8] sm:$0xff]
        %v368 = vld [vmem:[%s334 + $0xf0] sm:$0xff]
        %v369 = vld [vmem:[%s334 + $0xf8] sm:$0xff]
        %v370 = vld [vmem:[%s334 + $0x100] sm:$0xff]
        %v371 = vld [vmem:[%s334 + $0x108] sm:$0xff]
        %v372 = vld [vmem:[%s334 + $0x110] sm:$0xff]
        %v373 = vld [vmem:[%s334 + $0x118] sm:$0xff]
        %v374 = vld [vmem:[%s334 + $0x120] sm:$0xff]
        %v375 = vld [vmem:[%s334 + $0x128] sm:$0xff]
        %v376 = vld [vmem:[%s334 + $0x130] sm:$0xff]
        %v377 = vld [vmem:[%s334 + $0x138] sm:$0xff]
        %v378 = vld [vmem:[%s334 + $0x140] sm:$0xff]
        %v379 = vld [vmem:[%s334 + $0x148] sm:$0xff]
        %v380 = vld [vmem:[%s334 + $0x150] sm:$0xff]
        %v381 = vld [vmem:[%s334 + $0x158] sm:$0xff]
        %v382 = vld [vmem:[%s334 + $0x160] sm:$0xff]
        %v383 = vld [vmem:[%s334 + $0x168] sm:$0xff]
        %v384 = vld [vmem:[%s334 + $0x170] sm:$0xff]
        %v385 = vld [vmem:[%s334 + $0x178] sm:$0xff]
        %v386 = vld [vmem:[%s334 + $0x180] sm:$0xff]
        %v387 = vld [vmem:[%s334 + $0x188] sm:$0xff]
        %v388 = vld [vmem:[%s334 + $0x190] sm:$0xff]
        %v389 = vld [vmem:[%s334 + $0x198] sm:$0xff]
        %v390 = vld [vmem:[%s334 + $0x1a0] sm:$0xff]
        %v391 = vld [vmem:[%s334 + $0x1a8] sm:$0xff]
        %v392 = vld [vmem:[%s334 + $0x1b0] sm:$0xff]
        %v393 = vld [vmem:[%s334 + $0x1b8] sm:$0xff]
        %v394 = vld [vmem:[%s334 + $0x1c0] sm:$0xff]
        %v395 = vld [vmem:[%s334 + $0x1c8] sm:$0xff]
        %v396 = vld [vmem:[%s334 + $0x1d0] sm:$0xff]
        %v397 = vld [vmem:[%s334 + $0x1d8] sm:$0xff]
        %v398 = vld [vmem:[%s334 + $0x1e0] sm:$0xff]
        %v399 = vld [vmem:[%s334 + $0x1e8] sm:$0xff]
        %v400 = vld [vmem:[%s334 + $0x1f0] sm:$0xff]
        %v401 = vld [vmem:[%s334 + $0x1f8] sm:$0xff]
        %v402 = vpack.c.bf16 %v340, %v338
        %v403 = vpack.c.bf16 %v341, %v339
        %v404 = vpack.c.bf16 %v344, %v342
        %v405 = vpack.c.bf16 %v345, %v343
        %v406 = vpack.c.bf16 %v348, %v346
        %v407 = vpack.c.bf16 %v349, %v347
        %v408 = vpack.c.bf16 %v352, %v350
        %v409 = vpack.c.bf16 %v353, %v351
        %v410 = vpack.c.bf16 %v356, %v354
        %v411 = vpack.c.bf16 %v357, %v355
        %v412 = vpack.c.bf16 %v360, %v358
        %v413 = vpack.c.bf16 %v361, %v359
        %v414 = vpack.c.bf16 %v364, %v362
        %v415 = vpack.c.bf16 %v365, %v363
        %v416 = vpack.c.bf16 %v368, %v366
        %v417 = vpack.c.bf16 %v369, %v367
        %v418 = vpack.c.bf16 %v372, %v370
        %v419 = vpack.c.bf16 %v373, %v371
        %v420 = vpack.c.bf16 %v376, %v374
        %v421 = vpack.c.bf16 %v377, %v375
        %v422 = vpack.c.bf16 %v380, %v378
        %v423 = vpack.c.bf16 %v381, %v379
        %v424 = vpack.c.bf16 %v384, %v382
        %v425 = vpack.c.bf16 %v385, %v383
        %v426 = vpack.c.bf16 %v388, %v386
        %v427 = vpack.c.bf16 %v389, %v387
        %v428 = vpack.c.bf16 %v392, %v390
        %v429 = vpack.c.bf16 %v393, %v391
        %v430 = vpack.c.bf16 %v396, %v394
        %v431 = vpack.c.bf16 %v397, %v395
        %v432 = vpack.c.bf16 %v400, %v398
        %v433 = vpack.c.bf16 %v401, %v399
        %v434 = vld [vmem:[%s1] sm:$0xf]
        %v435 = vld [vmem:[%s1 + $0x4] sm:$0xf]
        %v436 = vld [vmem:[%s1 + $0x8] sm:$0xf]
        %v437 = vld [vmem:[%s1 + $0xc] sm:$0xf]
        %v438 = vld [vmem:[%s1 + $0x10] sm:$0xf]
        %v439 = vld [vmem:[%s1 + $0x14] sm:$0xf]
        %v440 = vld [vmem:[%s1 + $0x18] sm:$0xf]
        %v441 = vld [vmem:[%s1 + $0x1c] sm:$0xf]
        %v442 = vld [vmem:[%s1 + $0x20] sm:$0xf]
        %v443 = vld [vmem:[%s1 + $0x24] sm:$0xf]
        %v444 = vld [vmem:[%s1 + $0x28] sm:$0xf]
        %v445 = vld [vmem:[%s1 + $0x2c] sm:$0xf]
        %v446 = vld [vmem:[%s1 + $0x30] sm:$0xf]
        %v447 = vld [vmem:[%s1 + $0x34] sm:$0xf]
        %v448 = vld [vmem:[%s1 + $0x38] sm:$0xf]
        %v449 = vld [vmem:[%s1 + $0x3c] sm:$0xf]
        %v450 = vld [vmem:[%s1 + $0x40] sm:$0xf]
        %v451 = vld [vmem:[%s1 + $0x44] sm:$0xf]
        %v452 = vld [vmem:[%s1 + $0x48] sm:$0xf]
        %v453 = vld [vmem:[%s1 + $0x4c] sm:$0xf]
        %v454 = vld [vmem:[%s1 + $0x50] sm:$0xf]
        %v455 = vld [vmem:[%s1 + $0x54] sm:$0xf]
        %v456 = vld [vmem:[%s1 + $0x58] sm:$0xf]
        %v457 = vld [vmem:[%s1 + $0x5c] sm:$0xf]
        %v458 = vld [vmem:[%s1 + $0x60] sm:$0xf]
        %v459 = vld [vmem:[%s1 + $0x64] sm:$0xf]
        %v460 = vld [vmem:[%s1 + $0x68] sm:$0xf]
        %v461 = vld [vmem:[%s1 + $0x6c] sm:$0xf]
        %v462 = vld [vmem:[%s1 + $0x70] sm:$0xf]
        %v463 = vld [vmem:[%s1 + $0x74] sm:$0xf]
        %v464 = vld [vmem:[%s1 + $0x78] sm:$0xf]
        %v465 = vld [vmem:[%s1 + $0x7c] sm:$0xf]
        %v498 = vunpack.c.l.b16 %v434
        %v499 = vunpack.c.l.b16 %v435
        %v500 = vunpack.c.l.b16 %v436
        %v501 = vunpack.c.l.b16 %v437
        %v502 = vunpack.c.l.b16 %v438
        %v503 = vunpack.c.l.b16 %v439
        %v504 = vunpack.c.l.b16 %v440
        %v505 = vunpack.c.l.b16 %v441
        %v506 = vunpack.c.l.b16 %v442
        %v507 = vunpack.c.l.b16 %v443
        %v508 = vunpack.c.l.b16 %v444
        %v509 = vunpack.c.l.b16 %v445
        %v510 = vunpack.c.l.b16 %v446
        %v511 = vunpack.c.l.b16 %v447
        %v512 = vunpack.c.l.b16 %v448
        %v513 = vunpack.c.l.b16 %v449
        %v514 = vunpack.c.l.b16 %v450
        %v515 = vunpack.c.l.b16 %v451
        %v516 = vunpack.c.l.b16 %v452
        %v517 = vunpack.c.l.b16 %v453
        %v518 = vunpack.c.l.b16 %v454
        %v519 = vunpack.c.l.b16 %v455
        %v520 = vunpack.c.l.b16 %v456
        %v521 = vunpack.c.l.b16 %v457
        %v522 = vunpack.c.l.b16 %v458
        %v523 = vunpack.c.l.b16 %v459
        %v524 = vunpack.c.l.b16 %v460
        %v525 = vunpack.c.l.b16 %v461
        %v526 = vunpack.c.l.b16 %v462
        %v527 = vunpack.c.l.b16 %v463
        %v528 = vunpack.c.l.b16 %v464
        %v529 = vunpack.c.l.b16 %v465
        %v530 = vpack.c.b16 %v499, %v498
        %v531 = vpack.c.b16 %v501, %v500
        %v532 = vpack.c.b16 %v503, %v502
        %v533 = vpack.c.b16 %v505, %v504
        %v534 = vpack.c.b16 %v507, %v506
        %v535 = vpack.c.b16 %v509, %v508
        %v536 = vpack.c.b16 %v511, %v510
        %v537 = vpack.c.b16 %v513, %v512
        %v538 = vpack.c.b16 %v515, %v514
        %v539 = vpack.c.b16 %v517, %v516
        %v540 = vpack.c.b16 %v519, %v518
        %v541 = vpack.c.b16 %v521, %v520
        %v542 = vpack.c.b16 %v523, %v522
        %v543 = vpack.c.b16 %v525, %v524
        %v544 = vpack.c.b16 %v527, %v526
        %v545 = vpack.c.b16 %v529, %v528
        %562 = vmatprep.subr.bf16.mxu0 0
        %563 = vmatpush1.bf16.msra.mxu0 %v530
        %564 = vmatprep.subr.bf16.mxu0 0
        %565 = vmatpush1.bf16.msra.mxu0 %v531
        %566 = vmatprep.subr.bf16.mxu0 0
        %567 = vmatpush1.bf16.msra.mxu0 %v532
        %568 = vmatprep.subr.bf16.mxu0 0
        %569 = vmatpush1.bf16.msra.mxu0 %v533
        %570 = vmatprep.subr.bf16.mxu0 0
        %571 = vmatpush1.bf16.msra.mxu0 %v534
        %572 = vmatprep.subr.bf16.mxu0 0
        %573 = vmatpush1.bf16.msra.mxu0 %v535
        %574 = vmatprep.subr.bf16.mxu0 0
        %575 = vmatpush1.bf16.msra.mxu0 %v536
        %576 = vmatprep.subr.bf16.mxu0 0
        %577 = vmatpush1.bf16.msra.mxu0 %v537
        %578 = vmatprep.subr.bf16.mxu0 0
        %579 = vmatpush1.bf16.msra.mxu0 %v538
        %580 = vmatprep.subr.bf16.mxu0 0
        %581 = vmatpush1.bf16.msra.mxu0 %v539
        %582 = vmatprep.subr.bf16.mxu0 0
        %583 = vmatpush1.bf16.msra.mxu0 %v540
        %584 = vmatprep.subr.bf16.mxu0 0
        %585 = vmatpush1.bf16.msra.mxu0 %v541
        %586 = vmatprep.subr.bf16.mxu0 0
        %587 = vmatpush1.bf16.msra.mxu0 %v542
        %588 = vmatprep.subr.bf16.mxu0 0
        %589 = vmatpush1.bf16.msra.mxu0 %v543
        %590 = vmatprep.subr.bf16.mxu0 0
        %591 = vmatpush1.bf16.msra.mxu0 %v544
        %592 = vmatprep.subr.bf16.mxu0 0
        %593 = vmatpush1.bf16.msra.mxu0 %v545
        %594 = vmatprep.mubr.bf16.mxu0 %v403
        %595 = vmatmul.mubr.bf16.gmra.mrb[0].mxu0 %v402
        %v596 = vpop.f32.mrb[0].mxu0
        %v597 = vadd.f32 0.0, %v596
        %v598 = vpop.f32.mrb[0].mxu0
        %v599 = vpop.f32.mrb[0].mxu0
        %v600 = vadd.f32 0.0, %v599
        %v601 = vpop.f32.mrb[0].mxu0
        %602 = vmatprep.mubr.bf16.mxu0 %v405
        %603 = vmatmul.mubr.bf16.gmra.mrb[0].mxu0 %v404
        %v604 = vpop.f32.mrb[0].mxu0
        %v605 = vadd.f32 0.0, %v604
        %v606 = vpop.f32.mrb[0].mxu0
        %v607 = vpop.f32.mrb[0].mxu0
        %v608 = vadd.f32 0.0, %v607
        %v609 = vpop.f32.mrb[0].mxu0
        %610 = vmatprep.mubr.bf16.mxu0 %v407
        %611 = vmatmul.mubr.bf16.gmra.mrb[0].mxu0 %v406
        %v612 = vpop.f32.mrb[0].mxu0
        %v613 = vadd.f32 0.0, %v612
        %v614 = vpop.f32.mrb[0].mxu0
        %v615 = vpop.f32.mrb[0].mxu0
        %v616 = vadd.f32 0.0, %v615
        %v617 = vpop.f32.mrb[0].mxu0
        %618 = vmatprep.mubr.bf16.mxu0 %v409
        %619 = vmatmul.mubr.bf16.gmra.mrb[0].mxu0 %v408
        %v620 = vpop.f32.mrb[0].mxu0
        %v621 = vadd.f32 0.0, %v620
        %v622 = vpop.f32.mrb[0].mxu0
        %v623 = vpop.f32.mrb[0].mxu0
        %v624 = vadd.f32 0.0, %v623
        %v625 = vpop.f32.mrb[0].mxu0
        %626 = vmatprep.mubr.bf16.mxu0 %v411
        %627 = vmatmul.mubr.bf16.gmra.mrb[0].mxu0 %v410
        %v628 = vpop.f32.mrb[0].mxu0
        %v629 = vadd.f32 0.0, %v628
        %v630 = vpop.f32.mrb[0].mxu0
        %v631 = vpop.f32.mrb[0].mxu0
        %v632 = vadd.f32 0.0, %v631
        %v633 = vpop.f32.mrb[0].mxu0
        %634 = vmatprep.mubr.bf16.mxu0 %v413
        %635 = vmatmul.mubr.bf16.gmra.mrb[0].mxu0 %v412
        %v636 = vpop.f32.mrb[0].mxu0
        %v637 = vadd.f32 0.0, %v636
        %v638 = vpop.f32.mrb[0].mxu0
        %v639 = vpop.f32.mrb[0].mxu0
        %v640 = vadd.f32 0.0, %v639
        %v641 = vpop.f32.mrb[0].mxu0
        %642 = vmatprep.mubr.bf16.mxu0 %v415
        %643 = vmatmul.mubr.bf16.gmra.mrb[0].mxu0 %v414
        %v644 = vpop.f32.mrb[0].mxu0
        %v645 = vadd.f32 0.0, %v644
        %v646 = vpop.f32.mrb[0].mxu0
        %v647 = vpop.f32.mrb[0].mxu0
        %v648 = vadd.f32 0.0, %v647
        %v649 = vpop.f32.mrb[0].mxu0
        %650 = vmatprep.mubr.bf16.mxu0 %v417
        %651 = vmatmul.mubr.bf16.gmra.mrb[0].mxu0 %v416
        %v652 = vpop.f32.mrb[0].mxu0
        %v653 = vadd.f32 0.0, %v652
        %v654 = vpop.f32.mrb[0].mxu0
        %v655 = vpop.f32.mrb[0].mxu0
        %v656 = vadd.f32 0.0, %v655
        %v657 = vpop.f32.mrb[0].mxu0
        %658 = vmatprep.mubr.bf16.mxu0 %v419
        %659 = vmatmul.mubr.bf16.gmra.mrb[0].mxu0 %v418
        %v660 = vpop.f32.mrb[0].mxu0
        %v661 = vadd.f32 0.0, %v660
        %v662 = vpop.f32.mrb[0].mxu0
        %v663 = vpop.f32.mrb[0].mxu0
        %v664 = vadd.f32 0.0, %v663
        %v665 = vpop.f32.mrb[0].mxu0
        %666 = vmatprep.mubr.bf16.mxu0 %v421
        %667 = vmatmul.mubr.bf16.gmra.mrb[0].mxu0 %v420
        %v668 = vpop.f32.mrb[0].mxu0
        %v669 = vadd.f32 0.0, %v668
        %v670 = vpop.f32.mrb[0].mxu0
        %v671 = vpop.f32.mrb[0].mxu0
        %v672 = vadd.f32 0.0, %v671
        %v673 = vpop.f32.mrb[0].mxu0
        %674 = vmatprep.mubr.bf16.mxu0 %v423
        %675 = vmatmul.mubr.bf16.gmra.mrb[0].mxu0 %v422
        %v676 = vpop.f32.mrb[0].mxu0
        %v677 = vadd.f32 0.0, %v676
        %v678 = vpop.f32.mrb[0].mxu0
        %v679 = vpop.f32.mrb[0].mxu0
        %v680 = vadd.f32 0.0, %v679
        %v681 = vpop.f32.mrb[0].mxu0
        %682 = vmatprep.mubr.bf16.mxu0 %v425
        %683 = vmatmul.mubr.bf16.gmra.mrb[0].mxu0 %v424
        %v684 = vpop.f32.mrb[0].mxu0
        %v685 = vadd.f32 0.0, %v684
        %v686 = vpop.f32.mrb[0].mxu0
        %v687 = vpop.f32.mrb[0].mxu0
        %v688 = vadd.f32 0.0, %v687
        %v689 = vpop.f32.mrb[0].mxu0
        %690 = vmatprep.mubr.bf16.mxu0 %v427
        %691 = vmatmul.mubr.bf16.gmra.mrb[0].mxu0 %v426
        %v692 = vpop.f32.mrb[0].mxu0
        %v693 = vadd.f32 0.0, %v692
        %v694 = vpop.f32.mrb[0].mxu0
        %v695 = vpop.f32.mrb[0].mxu0
        %v696 = vadd.f32 0.0, %v695
        %v697 = vpop.f32.mrb[0].mxu0
        %698 = vmatprep.mubr.bf16.mxu0 %v429
        %699 = vmatmul.mubr.bf16.gmra.mrb[0].mxu0 %v428
        %v700 = vpop.f32.mrb[0].mxu0
        %v701 = vadd.f32 0.0, %v700
        %v702 = vpop.f32.mrb[0].mxu0
        %v703 = vpop.f32.mrb[0].mxu0
        %v704 = vadd.f32 0.0, %v703
        %v705 = vpop.f32.mrb[0].mxu0
        %706 = vmatprep.mubr.bf16.mxu0 %v431
        %707 = vmatmul.mubr.bf16.gmra.mrb[0].mxu0 %v430
        %v708 = vpop.f32.mrb[0].mxu0
        %v709 = vadd.f32 0.0, %v708
        %v710 = vpop.f32.mrb[0].mxu0
        %v711 = vpop.f32.mrb[0].mxu0
        %v712 = vadd.f32 0.0, %v711
        %v713 = vpop.f32.mrb[0].mxu0
        %714 = vmatprep.mubr.bf16.mxu0 %v433
        %715 = vmatmul.mubr.bf16.gmra.mrb[0].mxu0 %v432
        %v716 = vpop.f32.mrb[0].mxu0
        %v717 = vadd.f32 0.0, %v716
        %v718 = vpop.f32.mrb[0].mxu0
        %v719 = vpop.f32.mrb[0].mxu0
        %v720 = vadd.f32 0.0, %v719
        %v721 = vpop.f32.mrb[0].mxu0
        %722 = vdwg.mxu0
        %v723 = vld [vmem:[%s2] sm:$0xff]
        %v724 = vld [vmem:[%s2 + $0x8] sm:$0xff]
        %v725 = vld [vmem:[%s2 + $0x10] sm:$0xff]
        %v726 = vld [vmem:[%s2 + $0x18] sm:$0xff]
        %v727 = vld [vmem:[%s2 + $0x20] sm:$0xff]
        %v728 = vld [vmem:[%s2 + $0x28] sm:$0xff]
        %v729 = vld [vmem:[%s2 + $0x30] sm:$0xff]
        %v730 = vld [vmem:[%s2 + $0x38] sm:$0xff]
        %v731 = vld [vmem:[%s2 + $0x40] sm:$0xff]
        %v732 = vld [vmem:[%s2 + $0x48] sm:$0xff]
        %v733 = vld [vmem:[%s2 + $0x50] sm:$0xff]
        %v734 = vld [vmem:[%s2 + $0x58] sm:$0xff]
        %v735 = vld [vmem:[%s2 + $0x60] sm:$0xff]
        %v736 = vld [vmem:[%s2 + $0x68] sm:$0xff]
        %v737 = vld [vmem:[%s2 + $0x70] sm:$0xff]
        %v738 = vld [vmem:[%s2 + $0x78] sm:$0xff]
        %739 = vmatprep.subr.mxu0 0.0
        %740 = vmatpush1.msra.mxu0 %v723
        %741 = vmatprep.subr.mxu0 0.0
        %742 = vmatpush1.msra.mxu0 %v724
        %743 = vmatprep.subr.mxu0 0.0
        %744 = vmatpush1.msra.mxu0 %v725
        %745 = vmatprep.subr.mxu0 0.0
        %746 = vmatpush1.msra.mxu0 %v726
        %747 = vmatprep.subr.mxu0 0.0
        %748 = vmatpush1.msra.mxu0 %v727
        %749 = vmatprep.subr.mxu0 0.0
        %750 = vmatpush1.msra.mxu0 %v728
        %751 = vmatprep.subr.mxu0 0.0
        %752 = vmatpush1.msra.mxu0 %v729
        %753 = vmatprep.subr.mxu0 0.0
        %754 = vmatpush1.msra.mxu0 %v730
        %755 = vmatprep.subr.mxu0 0.0
        %756 = vmatpush1.msra.mxu0 %v731
        %757 = vmatprep.subr.mxu0 0.0
        %758 = vmatpush1.msra.mxu0 %v732
        %759 = vmatprep.subr.mxu0 0.0
        %760 = vmatpush1.msra.mxu0 %v733
        %761 = vmatprep.subr.mxu0 0.0
        %762 = vmatpush1.msra.mxu0 %v734
        %763 = vmatprep.subr.mxu0 0.0
        %764 = vmatpush1.msra.mxu0 %v735
        %765 = vmatprep.subr.mxu0 0.0
        %766 = vmatpush1.msra.mxu0 %v736
        %767 = vmatprep.subr.mxu0 0.0
        %768 = vmatpush1.msra.mxu0 %v737
        %769 = vmatprep.subr.mxu0 0.0
        %770 = vmatpush1.msra.mxu0 %v738
        %771 = vmatprep.subr.mxu0 0.0
        %772 = vmatpush1.msra.mxu0 0.0
        %773 = vmatprep.subr.mxu0 0.0
        %774 = vmatpush1.msra.mxu0 0.0
        %775 = vmatprep.subr.mxu0 0.0
        %776 = vmatpush1.msra.mxu0 0.0
        %777 = vmatprep.subr.mxu0 0.0
        %778 = vmatpush1.msra.mxu0 0.0
        %779 = vmatprep.subr.mxu0 0.0
        %780 = vmatpush1.msra.mxu0 0.0
        %781 = vmatprep.subr.mxu0 0.0
        %782 = vmatpush1.msra.mxu0 0.0
        %783 = vmatprep.subr.mxu0 0.0
        %784 = vmatpush1.msra.mxu0 0.0
        %785 = vmatprep.subr.mxu0 0.0
        %786 = vmatpush1.msra.mxu0 0.0
        %787 = vmatprep.subr.mxu0 0.0
        %788 = vmatpush1.msra.mxu0 0.0
        %789 = vmatprep.subr.mxu0 0.0
        %790 = vmatpush1.msra.mxu0 0.0
        %791 = vmatprep.subr.mxu0 0.0
        %792 = vmatpush1.msra.mxu0 0.0
        %793 = vmatprep.subr.mxu0 0.0
        %794 = vmatpush1.msra.mxu0 0.0
        %795 = vmatprep.subr.mxu0 0.0
        %796 = vmatpush1.msra.mxu0 0.0
        %797 = vmatprep.subr.mxu0 0.0
        %798 = vmatpush1.msra.mxu0 0.0
        %799 = vmatprep.subr.mxu0 0.0
        %800 = vmatpush1.msra.mxu0 0.0
        %801 = vmatprep.subr.mxu0 0.0
        %802 = vmatpush1.msra.mxu0 0.0
        %803 = vmatprep.mubr.f32.mxu0 0.0
        %804 = vmatmul.mubr.f32.gmra.mrb[0].mxu0 %v597
        %v805 = vpop.f32.mrb[0].mxu0
        %v806 = vadd.f32 0.0, %v805
        %v807 = vpop.f32.mrb[0].mxu0
        %808 = vmatprep.mubr.f32.mxu0 0.0
        %809 = vmatmul.mubr.f32.gmra.mrb[0].mxu0 %v600
        %v810 = vpop.f32.mrb[0].mxu0
        %v811 = vadd.f32 0.0, %v810
        %v812 = vpop.f32.mrb[0].mxu0
        %813 = vmatprep.mubr.f32.mxu0 0.0
        %814 = vmatmul.mubr.f32.gmra.mrb[0].mxu0 %v605
        %v815 = vpop.f32.mrb[0].mxu0
        %v816 = vadd.f32 0.0, %v815
        %v817 = vpop.f32.mrb[0].mxu0
        %818 = vmatprep.mubr.f32.mxu0 0.0
        %819 = vmatmul.mubr.f32.gmra.mrb[0].mxu0 %v608
        %v820 = vpop.f32.mrb[0].mxu0
        %v821 = vadd.f32 0.0, %v820
        %v822 = vpop.f32.mrb[0].mxu0
        %823 = vmatprep.mubr.f32.mxu0 0.0
        %824 = vmatmul.mubr.f32.gmra.mrb[0].mxu0 %v613
        %v825 = vpop.f32.mrb[0].mxu0
        %v826 = vadd.f32 0.0, %v825
        %v827 = vpop.f32.mrb[0].mxu0
        %828 = vmatprep.mubr.f32.mxu0 0.0
        %829 = vmatmul.mubr.f32.gmra.mrb[0].mxu0 %v616
        %v830 = vpop.f32.mrb[0].mxu0
        %v831 = vadd.f32 0.0, %v830
        %v832 = vpop.f32.mrb[0].mxu0
        %833 = vmatprep.mubr.f32.mxu0 0.0
        %834 = vmatmul.mubr.f32.gmra.mrb[0].mxu0 %v621
        %v835 = vpop.f32.mrb[0].mxu0
        %v836 = vadd.f32 0.0, %v835
        %v837 = vpop.f32.mrb[0].mxu0
        %838 = vmatprep.mubr.f32.mxu0 0.0
        %839 = vmatmul.mubr.f32.gmra.mrb[0].mxu0 %v624
        %v840 = vpop.f32.mrb[0].mxu0
        %v841 = vadd.f32 0.0, %v840
        %v842 = vpop.f32.mrb[0].mxu0
        %843 = vmatprep.mubr.f32.mxu0 0.0
        %844 = vmatmul.mubr.f32.gmra.mrb[0].mxu0 %v629
        %v845 = vpop.f32.mrb[0].mxu0
        %v846 = vadd.f32 0.0, %v845
        %v847 = vpop.f32.mrb[0].mxu0
        %848 = vmatprep.mubr.f32.mxu0 0.0
        %849 = vmatmul.mubr.f32.gmra.mrb[0].mxu0 %v632
        %v850 = vpop.f32.mrb[0].mxu0
        %v851 = vadd.f32 0.0, %v850
        %v852 = vpop.f32.mrb[0].mxu0
        %853 = vmatprep.mubr.f32.mxu0 0.0
        %854 = vmatmul.mubr.f32.gmra.mrb[0].mxu0 %v637
        %v855 = vpop.f32.mrb[0].mxu0
        %v856 = vadd.f32 0.0, %v855
        %v857 = vpop.f32.mrb[0].mxu0
        %858 = vmatprep.mubr.f32.mxu0 0.0
        %859 = vmatmul.mubr.f32.gmra.mrb[0].mxu0 %v640
        %v860 = vpop.f32.mrb[0].mxu0
        %v861 = vadd.f32 0.0, %v860
        %v862 = vpop.f32.mrb[0].mxu0
        %863 = vmatprep.mubr.f32.mxu0 0.0
        %864 = vmatmul.mubr.f32.gmra.mrb[0].mxu0 %v645
        %v865 = vpop.f32.mrb[0].mxu0
        %v866 = vadd.f32 0.0, %v865
        %v867 = vpop.f32.mrb[0].mxu0
        %868 = vmatprep.mubr.f32.mxu0 0.0
        %869 = vmatmul.mubr.f32.gmra.mrb[0].mxu0 %v648
        %v870 = vpop.f32.mrb[0].mxu0
        %v871 = vadd.f32 0.0, %v870
        %v872 = vpop.f32.mrb[0].mxu0
        %873 = vmatprep.mubr.f32.mxu0 0.0
        %874 = vmatmul.mubr.f32.gmra.mrb[0].mxu0 %v653
        %v875 = vpop.f32.mrb[0].mxu0
        %v876 = vadd.f32 0.0, %v875
        %v877 = vpop.f32.mrb[0].mxu0
        %878 = vmatprep.mubr.f32.mxu0 0.0
        %879 = vmatmul.mubr.f32.gmra.mrb[0].mxu0 %v656
        %v880 = vpop.f32.mrb[0].mxu0
        %v881 = vadd.f32 0.0, %v880
        %v882 = vpop.f32.mrb[0].mxu0
        %883 = vmatprep.mubr.f32.mxu0 0.0
        %884 = vmatmul.mubr.f32.gmra.mrb[0].mxu0 %v661
        %v885 = vpop.f32.mrb[0].mxu0
        %v886 = vadd.f32 0.0, %v885
        %v887 = vpop.f32.mrb[0].mxu0
        %888 = vmatprep.mubr.f32.mxu0 0.0
        %889 = vmatmul.mubr.f32.gmra.mrb[0].mxu0 %v664
        %v890 = vpop.f32.mrb[0].mxu0
        %v891 = vadd.f32 0.0, %v890
        %v892 = vpop.f32.mrb[0].mxu0
        %893 = vmatprep.mubr.f32.mxu0 0.0
        %894 = vmatmul.mubr.f32.gmra.mrb[0].mxu0 %v669
        %v895 = vpop.f32.mrb[0].mxu0
        %v896 = vadd.f32 0.0, %v895
        %v897 = vpop.f32.mrb[0].mxu0
        %898 = vmatprep.mubr.f32.mxu0 0.0
        %899 = vmatmul.mubr.f32.gmra.mrb[0].mxu0 %v672
        %v900 = vpop.f32.mrb[0].mxu0
        %v901 = vadd.f32 0.0, %v900
        %v902 = vpop.f32.mrb[0].mxu0
        %903 = vmatprep.mubr.f32.mxu0 0.0
        %904 = vmatmul.mubr.f32.gmra.mrb[0].mxu0 %v677
        %v905 = vpop.f32.mrb[0].mxu0
        %v906 = vadd.f32 0.0, %v905
        %v907 = vpop.f32.mrb[0].mxu0
        %908 = vmatprep.mubr.f32.mxu0 0.0
        %909 = vmatmul.mubr.f32.gmra.mrb[0].mxu0 %v680
        %v910 = vpop.f32.mrb[0].mxu0
        %v911 = vadd.f32 0.0, %v910
        %v912 = vpop.f32.mrb[0].mxu0
        %913 = vmatprep.mubr.f32.mxu0 0.0
        %914 = vmatmul.mubr.f32.gmra.mrb[0].mxu0 %v685
        %v915 = vpop.f32.mrb[0].mxu0
        %v916 = vadd.f32 0.0, %v915
        %v917 = vpop.f32.mrb[0].mxu0
        %918 = vmatprep.mubr.f32.mxu0 0.0
        %919 = vmatmul.mubr.f32.gmra.mrb[0].mxu0 %v688
        %v920 = vpop.f32.mrb[0].mxu0
        %v921 = vadd.f32 0.0, %v920
        %v922 = vpop.f32.mrb[0].mxu0
        %923 = vmatprep.mubr.f32.mxu0 0.0
        %924 = vmatmul.mubr.f32.gmra.mrb[0].mxu0 %v693
        %v925 = vpop.f32.mrb[0].mxu0
        %v926 = vadd.f32 0.0, %v925
        %v927 = vpop.f32.mrb[0].mxu0
        %928 = vmatprep.mubr.f32.mxu0 0.0
        %929 = vmatmul.mubr.f32.gmra.mrb[0].mxu0 %v696
        %v930 = vpop.f32.mrb[0].mxu0
        %v931 = vadd.f32 0.0, %v930
        %v932 = vpop.f32.mrb[0].mxu0
        %933 = vmatprep.mubr.f32.mxu0 0.0
        %934 = vmatmul.mubr.f32.gmra.mrb[0].mxu0 %v701
        %v935 = vpop.f32.mrb[0].mxu0
        %v936 = vadd.f32 0.0, %v935
        %v937 = vpop.f32.mrb[0].mxu0
        %938 = vmatprep.mubr.f32.mxu0 0.0
        %939 = vmatmul.mubr.f32.gmra.mrb[0].mxu0 %v704
        %v940 = vpop.f32.mrb[0].mxu0
        %v941 = vadd.f32 0.0, %v940
        %v942 = vpop.f32.mrb[0].mxu0
        %943 = vmatprep.mubr.f32.mxu0 0.0
        %944 = vmatmul.mubr.f32.gmra.mrb[0].mxu0 %v709
        %v945 = vpop.f32.mrb[0].mxu0
        %v946 = vadd.f32 0.0, %v945
        %v947 = vpop.f32.mrb[0].mxu0
        %948 = vmatprep.mubr.f32.mxu0 0.0
        %949 = vmatmul.mubr.f32.gmra.mrb[0].mxu0 %v712
        %v950 = vpop.f32.mrb[0].mxu0
        %v951 = vadd.f32 0.0, %v950
        %v952 = vpop.f32.mrb[0].mxu0
        %953 = vmatprep.mubr.f32.mxu0 0.0
        %954 = vmatmul.mubr.f32.gmra.mrb[0].mxu0 %v717
        %v955 = vpop.f32.mrb[0].mxu0
        %v956 = vadd.f32 0.0, %v955
        %v957 = vpop.f32.mrb[0].mxu0
        %958 = vmatprep.mubr.f32.mxu0 0.0
        %959 = vmatmul.mubr.f32.gmra.mrb[0].mxu0 %v720
        %v960 = vpop.f32.mrb[0].mxu0
        %v961 = vadd.f32 0.0, %v960
        %v962 = vpop.f32.mrb[0].mxu0
        %963 = vdwg.mxu0
        %v964 = vmul.f32 %v597, %v597
        %v965 = vmul.f32 %v600, %v600
        %v966 = vmul.f32 %v605, %v605
        %v967 = vmul.f32 %v608, %v608
        %v968 = vmul.f32 %v613, %v613
        %v969 = vmul.f32 %v616, %v616
        %v970 = vmul.f32 %v621, %v621
        %v971 = vmul.f32 %v624, %v624
        %v972 = vmul.f32 %v629, %v629
        %v973 = vmul.f32 %v632, %v632
        %v974 = vmul.f32 %v637, %v637
        %v975 = vmul.f32 %v640, %v640
        %v976 = vmul.f32 %v645, %v645
        %v977 = vmul.f32 %v648, %v648
        %v978 = vmul.f32 %v653, %v653
        %v979 = vmul.f32 %v656, %v656
        %v980 = vmul.f32 %v661, %v661
        %v981 = vmul.f32 %v664, %v664
        %v982 = vmul.f32 %v669, %v669
        %v983 = vmul.f32 %v672, %v672
        %v984 = vmul.f32 %v677, %v677
        %v985 = vmul.f32 %v680, %v680
        %v986 = vmul.f32 %v685, %v685
        %v987 = vmul.f32 %v688, %v688
        %v988 = vmul.f32 %v693, %v693
        %v989 = vmul.f32 %v696, %v696
        %v990 = vmul.f32 %v701, %v701
        %v991 = vmul.f32 %v704, %v704
        %v992 = vmul.f32 %v709, %v709
        %v993 = vmul.f32 %v712, %v712
        %v994 = vmul.f32 %v717, %v717
        %v995 = vmul.f32 %v720, %v720
        %996 = vmatprep.subr.mxu0 0.0
        %997 = vmatpush1.msra.mxu0 %v723
        %998 = vmatprep.subr.mxu0 0.0
        %999 = vmatpush1.msra.mxu0 %v724
        %1000 = vmatprep.subr.mxu0 0.0
        %1001 = vmatpush1.msra.mxu0 %v725
        %1002 = vmatprep.subr.mxu0 0.0
        %1003 = vmatpush1.msra.mxu0 %v726
        %1004 = vmatprep.subr.mxu0 0.0
        %1005 = vmatpush1.msra.mxu0 %v727
        %1006 = vmatprep.subr.mxu0 0.0
        %1007 = vmatpush1.msra.mxu0 %v728
        %1008 = vmatprep.subr.mxu0 0.0
        %1009 = vmatpush1.msra.mxu0 %v729
        %1010 = vmatprep.subr.mxu0 0.0
        %1011 = vmatpush1.msra.mxu0 %v730
        %1012 = vmatprep.subr.mxu0 0.0
        %1013 = vmatpush1.msra.mxu0 %v731
        %1014 = vmatprep.subr.mxu0 0.0
        %1015 = vmatpush1.msra.mxu0 %v732
        %1016 = vmatprep.subr.mxu0 0.0
        %1017 = vmatpush1.msra.mxu0 %v733
        %1018 = vmatprep.subr.mxu0 0.0
        %1019 = vmatpush1.msra.mxu0 %v734
        %1020 = vmatprep.subr.mxu0 0.0
        %1021 = vmatpush1.msra.mxu0 %v735
        %1022 = vmatprep.subr.mxu0 0.0
        %1023 = vmatpush1.msra.mxu0 %v736
        %1024 = vmatprep.subr.mxu0 0.0
        %1025 = vmatpush1.msra.mxu0 %v737
        %1026 = vmatprep.subr.mxu0 0.0
        %1027 = vmatpush1.msra.mxu0 %v738
        %1028 = vmatprep.subr.mxu0 0.0
        %1029 = vmatpush1.msra.mxu0 0.0
        %1030 = vmatprep.subr.mxu0 0.0
        %1031 = vmatpush1.msra.mxu0 0.0
        %1032 = vmatprep.subr.mxu0 0.0
        %1033 = vmatpush1.msra.mxu0 0.0
        %1034 = vmatprep.subr.mxu0 0.0
        %1035 = vmatpush1.msra.mxu0 0.0
        %1036 = vmatprep.subr.mxu0 0.0
        %1037 = vmatpush1.msra.mxu0 0.0
        %1038 = vmatprep.subr.mxu0 0.0
        %1039 = vmatpush1.msra.mxu0 0.0
        %1040 = vmatprep.subr.mxu0 0.0
        %1041 = vmatpush1.msra.mxu0 0.0
        %1042 = vmatprep.subr.mxu0 0.0
        %1043 = vmatpush1.msra.mxu0 0.0
        %1044 = vmatprep.subr.mxu0 0.0
        %1045 = vmatpush1.msra.mxu0 0.0
        %1046 = vmatprep.subr.mxu0 0.0
        %1047 = vmatpush1.msra.mxu0 0.0
        %1048 = vmatprep.subr.mxu0 0.0
        %1049 = vmatpush1.msra.mxu0 0.0
        %1050 = vmatprep.subr.mxu0 0.0
        %1051 = vmatpush1.msra.mxu0 0.0
        %1052 = vmatprep.subr.mxu0 0.0
        %1053 = vmatpush1.msra.mxu0 0.0
        %1054 = vmatprep.subr.mxu0 0.0
        %1055 = vmatpush1.msra.mxu0 0.0
        %1056 = vmatprep.subr.mxu0 0.0
        %1057 = vmatpush1.msra.mxu0 0.0
        %1058 = vmatprep.subr.mxu0 0.0
        %1059 = vmatpush1.msra.mxu0 0.0
        %1060 = vmatprep.mubr.f32.mxu0 0.0
        %1061 = vmatmul.mubr.f32.gmra.mrb[0].mxu0 %v964
        %v1062 = vpop.f32.mrb[0].mxu0
        %v1063 = vadd.f32 0.0, %v1062
        %v1064 = vpop.f32.mrb[0].mxu0
        %1065 = vmatprep.mubr.f32.mxu0 0.0
        %1066 = vmatmul.mubr.f32.gmra.mrb[0].mxu0 %v965
        %v1067 = vpop.f32.mrb[0].mxu0
        %v1068 = vadd.f32 0.0, %v1067
        %v1069 = vpop.f32.mrb[0].mxu0
        %1070 = vmatprep.mubr.f32.mxu0 0.0
        %1071 = vmatmul.mubr.f32.gmra.mrb[0].mxu0 %v966
        %v1072 = vpop.f32.mrb[0].mxu0
        %v1073 = vadd.f32 0.0, %v1072
        %v1074 = vpop.f32.mrb[0].mxu0
        %1075 = vmatprep.mubr.f32.mxu0 0.0
        %1076 = vmatmul.mubr.f32.gmra.mrb[0].mxu0 %v967
        %v1077 = vpop.f32.mrb[0].mxu0
        %v1078 = vadd.f32 0.0, %v1077
        %v1079 = vpop.f32.mrb[0].mxu0
        %1080 = vmatprep.mubr.f32.mxu0 0.0
        %1081 = vmatmul.mubr.f32.gmra.mrb[0].mxu0 %v968
        %v1082 = vpop.f32.mrb[0].mxu0
        %v1083 = vadd.f32 0.0, %v1082
        %v1084 = vpop.f32.mrb[0].mxu0
        %1085 = vmatprep.mubr.f32.mxu0 0.0
        %1086 = vmatmul.mubr.f32.gmra.mrb[0].mxu0 %v969
        %v1087 = vpop.f32.mrb[0].mxu0
        %v1088 = vadd.f32 0.0, %v1087
        %v1089 = vpop.f32.mrb[0].mxu0
        %1090 = vmatprep.mubr.f32.mxu0 0.0
        %1091 = vmatmul.mubr.f32.gmra.mrb[0].mxu0 %v970
        %v1092 = vpop.f32.mrb[0].mxu0
        %v1093 = vadd.f32 0.0, %v1092
        %v1094 = vpop.f32.mrb[0].mxu0
        %1095 = vmatprep.mubr.f32.mxu0 0.0
        %1096 = vmatmul.mubr.f32.gmra.mrb[0].mxu0 %v971
        %v1097 = vpop.f32.mrb[0].mxu0
        %v1098 = vadd.f32 0.0, %v1097
        %v1099 = vpop.f32.mrb[0].mxu0
        %1100 = vmatprep.mubr.f32.mxu0 0.0
        %1101 = vmatmul.mubr.f32.gmra.mrb[0].mxu0 %v972
        %v1102 = vpop.f32.mrb[0].mxu0
        %v1103 = vadd.f32 0.0, %v1102
        %v1104 = vpop.f32.mrb[0].mxu0
        %1105 = vmatprep.mubr.f32.mxu0 0.0
        %1106 = vmatmul.mubr.f32.gmra.mrb[0].mxu0 %v973
        %v1107 = vpop.f32.mrb[0].mxu0
        %v1108 = vadd.f32 0.0, %v1107
        %v1109 = vpop.f32.mrb[0].mxu0
        %1110 = vmatprep.mubr.f32.mxu0 0.0
        %1111 = vmatmul.mubr.f32.gmra.mrb[0].mxu0 %v974
        %v1112 = vpop.f32.mrb[0].mxu0
        %v1113 = vadd.f32 0.0, %v1112
        %v1114 = vpop.f32.mrb[0].mxu0
        %1115 = vmatprep.mubr.f32.mxu0 0.0
        %1116 = vmatmul.mubr.f32.gmra.mrb[0].mxu0 %v975
        %v1117 = vpop.f32.mrb[0].mxu0
        %v1118 = vadd.f32 0.0, %v1117
        %v1119 = vpop.f32.mrb[0].mxu0
        %1120 = vmatprep.mubr.f32.mxu0 0.0
        %1121 = vmatmul.mubr.f32.gmra.mrb[0].mxu0 %v976
        %v1122 = vpop.f32.mrb[0].mxu0
        %v1123 = vadd.f32 0.0, %v1122
        %v1124 = vpop.f32.mrb[0].mxu0
        %1125 = vmatprep.mubr.f32.mxu0 0.0
        %1126 = vmatmul.mubr.f32.gmra.mrb[0].mxu0 %v977
        %v1127 = vpop.f32.mrb[0].mxu0
        %v1128 = vadd.f32 0.0, %v1127
        %v1129 = vpop.f32.mrb[0].mxu0
        %1130 = vmatprep.mubr.f32.mxu0 0.0
        %1131 = vmatmul.mubr.f32.gmra.mrb[0].mxu0 %v978
        %v1132 = vpop.f32.mrb[0].mxu0
        %v1133 = vadd.f32 0.0, %v1132
        %v1134 = vpop.f32.mrb[0].mxu0
        %1135 = vmatprep.mubr.f32.mxu0 0.0
        %1136 = vmatmul.mubr.f32.gmra.mrb[0].mxu0 %v979
        %v1137 = vpop.f32.mrb[0].mxu0
        %v1138 = vadd.f32 0.0, %v1137
        %v1139 = vpop.f32.mrb[0].mxu0
        %1140 = vmatprep.mubr.f32.mxu0 0.0
        %1141 = vmatmul.mubr.f32.gmra.mrb[0].mxu0 %v980
        %v1142 = vpop.f32.mrb[0].mxu0
        %v1143 = vadd.f32 0.0, %v1142
        %v1144 = vpop.f32.mrb[0].mxu0
        %1145 = vmatprep.mubr.f32.mxu0 0.0
        %1146 = vmatmul.mubr.f32.gmra.mrb[0].mxu0 %v981
        %v1147 = vpop.f32.mrb[0].mxu0
        %v1148 = vadd.f32 0.0, %v1147
        %v1149 = vpop.f32.mrb[0].mxu0
        %1150 = vmatprep.mubr.f32.mxu0 0.0
        %1151 = vmatmul.mubr.f32.gmra.mrb[0].mxu0 %v982
        %v1152 = vpop.f32.mrb[0].mxu0
        %v1153 = vadd.f32 0.0, %v1152
        %v1154 = vpop.f32.mrb[0].mxu0
        %1155 = vmatprep.mubr.f32.mxu0 0.0
        %1156 = vmatmul.mubr.f32.gmra.mrb[0].mxu0 %v983
        %v1157 = vpop.f32.mrb[0].mxu0
        %v1158 = vadd.f32 0.0, %v1157
        %v1159 = vpop.f32.mrb[0].mxu0
        %1160 = vmatprep.mubr.f32.mxu0 0.0
        %1161 = vmatmul.mubr.f32.gmra.mrb[0].mxu0 %v984
        %v1162 = vpop.f32.mrb[0].mxu0
        %v1163 = vadd.f32 0.0, %v1162
        %v1164 = vpop.f32.mrb[0].mxu0
        %1165 = vmatprep.mubr.f32.mxu0 0.0
        %1166 = vmatmul.mubr.f32.gmra.mrb[0].mxu0 %v985
        %v1167 = vpop.f32.mrb[0].mxu0
        %v1168 = vadd.f32 0.0, %v1167
        %v1169 = vpop.f32.mrb[0].mxu0
        %1170 = vmatprep.mubr.f32.mxu0 0.0
        %1171 = vmatmul.mubr.f32.gmra.mrb[0].mxu0 %v986
        %v1172 = vpop.f32.mrb[0].mxu0
        %v1173 = vadd.f32 0.0, %v1172
        %v1174 = vpop.f32.mrb[0].mxu0
        %1175 = vmatprep.mubr.f32.mxu0 0.0
        %1176 = vmatmul.mubr.f32.gmra.mrb[0].mxu0 %v987
        %v1177 = vpop.f32.mrb[0].mxu0
        %v1178 = vadd.f32 0.0, %v1177
        %v1179 = vpop.f32.mrb[0].mxu0
        %1180 = vmatprep.mubr.f32.mxu0 0.0
        %1181 = vmatmul.mubr.f32.gmra.mrb[0].mxu0 %v988
        %v1182 = vpop.f32.mrb[0].mxu0
        %v1183 = vadd.f32 0.0, %v1182
        %v1184 = vpop.f32.mrb[0].mxu0
        %1185 = vmatprep.mubr.f32.mxu0 0.0
        %1186 = vmatmul.mubr.f32.gmra.mrb[0].mxu0 %v989
        %v1187 = vpop.f32.mrb[0].mxu0
        %v1188 = vadd.f32 0.0, %v1187
        %v1189 = vpop.f32.mrb[0].mxu0
        %1190 = vmatprep.mubr.f32.mxu0 0.0
        %1191 = vmatmul.mubr.f32.gmra.mrb[0].mxu0 %v990
        %v1192 = vpop.f32.mrb[0].mxu0
        %v1193 = vadd.f32 0.0, %v1192
        %v1194 = vpop.f32.mrb[0].mxu0
        %1195 = vmatprep.mubr.f32.mxu0 0.0
        %1196 = vmatmul.mubr.f32.gmra.mrb[0].mxu0 %v991
        %v1197 = vpop.f32.mrb[0].mxu0
        %v1198 = vadd.f32 0.0, %v1197
        %v1199 = vpop.f32.mrb[0].mxu0
        %1200 = vmatprep.mubr.f32.mxu0 0.0
        %1201 = vmatmul.mubr.f32.gmra.mrb[0].mxu0 %v992
        %v1202 = vpop.f32.mrb[0].mxu0
        %v1203 = vadd.f32 0.0, %v1202
        %v1204 = vpop.f32.mrb[0].mxu0
        %1205 = vmatprep.mubr.f32.mxu0 0.0
        %1206 = vmatmul.mubr.f32.gmra.mrb[0].mxu0 %v993
        %v1207 = vpop.f32.mrb[0].mxu0
        %v1208 = vadd.f32 0.0, %v1207
        %v1209 = vpop.f32.mrb[0].mxu0
        %1210 = vmatprep.mubr.f32.mxu0 0.0
        %1211 = vmatmul.mubr.f32.gmra.mrb[0].mxu0 %v994
        %v1212 = vpop.f32.mrb[0].mxu0
        %v1213 = vadd.f32 0.0, %v1212
        %v1214 = vpop.f32.mrb[0].mxu0
        %1215 = vmatprep.mubr.f32.mxu0 0.0
        %1216 = vmatmul.mubr.f32.gmra.mrb[0].mxu0 %v995
        %v1217 = vpop.f32.mrb[0].mxu0
        %v1218 = vadd.f32 0.0, %v1217
        %v1219 = vpop.f32.mrb[0].mxu0
        %1220 = vdwg.mxu0
        %v1221 = vmul.f32 %v806, %v806
        %v1222 = vmul.f32 %v811, %v811
        %v1223 = vmul.f32 %v816, %v816
        %v1224 = vmul.f32 %v821, %v821
        %v1225 = vmul.f32 %v826, %v826
        %v1226 = vmul.f32 %v831, %v831
        %v1227 = vmul.f32 %v836, %v836
        %v1228 = vmul.f32 %v841, %v841
        %v1229 = vmul.f32 %v846, %v846
        %v1230 = vmul.f32 %v851, %v851
        %v1231 = vmul.f32 %v856, %v856
        %v1232 = vmul.f32 %v861, %v861
        %v1233 = vmul.f32 %v866, %v866
        %v1234 = vmul.f32 %v871, %v871
        %v1235 = vmul.f32 %v876, %v876
        %v1236 = vmul.f32 %v881, %v881
        %v1237 = vmul.f32 %v886, %v886
        %v1238 = vmul.f32 %v891, %v891
        %v1239 = vmul.f32 %v896, %v896
        %v1240 = vmul.f32 %v901, %v901
        %v1241 = vmul.f32 %v906, %v906
        %v1242 = vmul.f32 %v911, %v911
        %v1243 = vmul.f32 %v916, %v916
        %v1244 = vmul.f32 %v921, %v921
        %v1245 = vmul.f32 %v926, %v926
        %v1246 = vmul.f32 %v931, %v931
        %v1247 = vmul.f32 %v936, %v936
        %v1248 = vmul.f32 %v941, %v941
        %v1249 = vmul.f32 %v946, %v946
        %v1250 = vmul.f32 %v951, %v951
        %v1251 = vmul.f32 %v956, %v956
        %v1252 = vmul.f32 %v961, %v961
        %v1253 = vsub.f32 %v1063, %v1221
        %v1254 = vsub.f32 %v1068, %v1222
        %v1255 = vsub.f32 %v1073, %v1223
        %v1256 = vsub.f32 %v1078, %v1224
        %v1257 = vsub.f32 %v1083, %v1225
        %v1258 = vsub.f32 %v1088, %v1226
        %v1259 = vsub.f32 %v1093, %v1227
        %v1260 = vsub.f32 %v1098, %v1228
        %v1261 = vsub.f32 %v1103, %v1229
        %v1262 = vsub.f32 %v1108, %v1230
        %v1263 = vsub.f32 %v1113, %v1231
        %v1264 = vsub.f32 %v1118, %v1232
        %v1265 = vsub.f32 %v1123, %v1233
        %v1266 = vsub.f32 %v1128, %v1234
        %v1267 = vsub.f32 %v1133, %v1235
        %v1268 = vsub.f32 %v1138, %v1236
        %v1269 = vsub.f32 %v1143, %v1237
        %v1270 = vsub.f32 %v1148, %v1238
        %v1271 = vsub.f32 %v1153, %v1239
        %v1272 = vsub.f32 %v1158, %v1240
        %v1273 = vsub.f32 %v1163, %v1241
        %v1274 = vsub.f32 %v1168, %v1242
        %v1275 = vsub.f32 %v1173, %v1243
        %v1276 = vsub.f32 %v1178, %v1244
        %v1277 = vsub.f32 %v1183, %v1245
        %v1278 = vsub.f32 %v1188, %v1246
        %v1279 = vsub.f32 %v1193, %v1247
        %v1280 = vsub.f32 %v1198, %v1248
        %v1281 = vsub.f32 %v1203, %v1249
        %v1282 = vsub.f32 %v1208, %v1250
        %v1283 = vsub.f32 %v1213, %v1251
        %v1284 = vsub.f32 %v1218, %v1252
        %v1285 = vmax.f32 %v1253, 0.0
        %v1286 = vmax.f32 %v1254, 0.0
        %v1287 = vmax.f32 %v1255, 0.0
        %v1288 = vmax.f32 %v1256, 0.0
        %v1289 = vmax.f32 %v1257, 0.0
        %v1290 = vmax.f32 %v1258, 0.0
        %v1291 = vmax.f32 %v1259, 0.0
        %v1292 = vmax.f32 %v1260, 0.0
        %v1293 = vmax.f32 %v1261, 0.0
        %v1294 = vmax.f32 %v1262, 0.0
        %v1295 = vmax.f32 %v1263, 0.0
        %v1296 = vmax.f32 %v1264, 0.0
        %v1297 = vmax.f32 %v1265, 0.0
        %v1298 = vmax.f32 %v1266, 0.0
        %v1299 = vmax.f32 %v1267, 0.0
        %v1300 = vmax.f32 %v1268, 0.0
        %v1301 = vmax.f32 %v1269, 0.0
        %v1302 = vmax.f32 %v1270, 0.0
        %v1303 = vmax.f32 %v1271, 0.0
        %v1304 = vmax.f32 %v1272, 0.0
        %v1305 = vmax.f32 %v1273, 0.0
        %v1306 = vmax.f32 %v1274, 0.0
        %v1307 = vmax.f32 %v1275, 0.0
        %v1308 = vmax.f32 %v1276, 0.0
        %v1309 = vmax.f32 %v1277, 0.0
        %v1310 = vmax.f32 %v1278, 0.0
        %v1311 = vmax.f32 %v1279, 0.0
        %v1312 = vmax.f32 %v1280, 0.0
        %v1313 = vmax.f32 %v1281, 0.0
        %v1314 = vmax.f32 %v1282, 0.0
        %v1315 = vmax.f32 %v1283, 0.0
        %v1316 = vmax.f32 %v1284, 0.0
        %v1317 = vsub.f32 %v597, %v806
        %v1318 = vsub.f32 %v600, %v811
        %v1319 = vsub.f32 %v605, %v816
        %v1320 = vsub.f32 %v608, %v821
        %v1321 = vsub.f32 %v613, %v826
        %v1322 = vsub.f32 %v616, %v831
        %v1323 = vsub.f32 %v621, %v836
        %v1324 = vsub.f32 %v624, %v841
        %v1325 = vsub.f32 %v629, %v846
        %v1326 = vsub.f32 %v632, %v851
        %v1327 = vsub.f32 %v637, %v856
        %v1328 = vsub.f32 %v640, %v861
        %v1329 = vsub.f32 %v645, %v866
        %v1330 = vsub.f32 %v648, %v871
        %v1331 = vsub.f32 %v653, %v876
        %v1332 = vsub.f32 %v656, %v881
        %v1333 = vsub.f32 %v661, %v886
        %v1334 = vsub.f32 %v664, %v891
        %v1335 = vsub.f32 %v669, %v896
        %v1336 = vsub.f32 %v672, %v901
        %v1337 = vsub.f32 %v677, %v906
        %v1338 = vsub.f32 %v680, %v911
        %v1339 = vsub.f32 %v685, %v916
        %v1340 = vsub.f32 %v688, %v921
        %v1341 = vsub.f32 %v693, %v926
        %v1342 = vsub.f32 %v696, %v931
        %v1343 = vsub.f32 %v701, %v936
        %v1344 = vsub.f32 %v704, %v941
        %v1345 = vsub.f32 %v709, %v946
        %v1346 = vsub.f32 %v712, %v951
        %v1347 = vsub.f32 %v717, %v956
        %v1348 = vsub.f32 %v720, %v961
        %v1349 = vadd.f32 %v1285, 1e-05
        %v1350 = vadd.f32 %v1286, 1e-05
        %v1351 = vadd.f32 %v1287, 1e-05
        %v1352 = vadd.f32 %v1288, 1e-05
        %v1353 = vadd.f32 %v1289, 1e-05
        %v1354 = vadd.f32 %v1290, 1e-05
        %v1355 = vadd.f32 %v1291, 1e-05
        %v1356 = vadd.f32 %v1292, 1e-05
        %v1357 = vadd.f32 %v1293, 1e-05
        %v1358 = vadd.f32 %v1294, 1e-05
        %v1359 = vadd.f32 %v1295, 1e-05
        %v1360 = vadd.f32 %v1296, 1e-05
        %v1361 = vadd.f32 %v1297, 1e-05
        %v1362 = vadd.f32 %v1298, 1e-05
        %v1363 = vadd.f32 %v1299, 1e-05
        %v1364 = vadd.f32 %v1300, 1e-05
        %v1365 = vadd.f32 %v1301, 1e-05
        %v1366 = vadd.f32 %v1302, 1e-05
        %v1367 = vadd.f32 %v1303, 1e-05
        %v1368 = vadd.f32 %v1304, 1e-05
        %v1369 = vadd.f32 %v1305, 1e-05
        %v1370 = vadd.f32 %v1306, 1e-05
        %v1371 = vadd.f32 %v1307, 1e-05
        %v1372 = vadd.f32 %v1308, 1e-05
        %v1373 = vadd.f32 %v1309, 1e-05
        %v1374 = vadd.f32 %v1310, 1e-05
        %v1375 = vadd.f32 %v1311, 1e-05
        %v1376 = vadd.f32 %v1312, 1e-05
        %v1377 = vadd.f32 %v1313, 1e-05
        %v1378 = vadd.f32 %v1314, 1e-05
        %v1379 = vadd.f32 %v1315, 1e-05
        %v1380 = vadd.f32 %v1316, 1e-05
        %v1381 = vrsqrt.pop %v1349
        %v1382 = vrsqrt.pop %v1350
        %v1383 = vrsqrt.pop %v1351
        %v1384 = vrsqrt.pop %v1352
        %v1385 = vrsqrt.pop %v1353
        %v1386 = vrsqrt.pop %v1354
        %v1387 = vrsqrt.pop %v1355
        %v1388 = vrsqrt.pop %v1356
        %v1389 = vrsqrt.pop %v1357
        %v1390 = vrsqrt.pop %v1358
        %v1391 = vrsqrt.pop %v1359
        %v1392 = vrsqrt.pop %v1360
        %v1393 = vrsqrt.pop %v1361
        %v1394 = vrsqrt.pop %v1362
        %v1395 = vrsqrt.pop %v1363
        %v1396 = vrsqrt.pop %v1364
        %v1397 = vrsqrt.pop %v1365
        %v1398 = vrsqrt.pop %v1366
        %v1399 = vrsqrt.pop %v1367
        %v1400 = vrsqrt.pop %v1368
        %v1401 = vrsqrt.pop %v1369
        %v1402 = vrsqrt.pop %v1370
        %v1403 = vrsqrt.pop %v1371
        %v1404 = vrsqrt.pop %v1372
        %v1405 = vrsqrt.pop %v1373
        %v1406 = vrsqrt.pop %v1374
        %v1407 = vrsqrt.pop %v1375
        %v1408 = vrsqrt.pop %v1376
        %v1409 = vrsqrt.pop %v1377
        %v1410 = vrsqrt.pop %v1378
        %v1411 = vrsqrt.pop %v1379
        %v1412 = vrsqrt.pop %v1380
        %v1413 = vmul.f32 %v1317, %v1381
        %v1414 = vmul.f32 %v1318, %v1382
        %v1415 = vmul.f32 %v1319, %v1383
        %v1416 = vmul.f32 %v1320, %v1384
        %v1417 = vmul.f32 %v1321, %v1385
        %v1418 = vmul.f32 %v1322, %v1386
        %v1419 = vmul.f32 %v1323, %v1387
        %v1420 = vmul.f32 %v1324, %v1388
        %v1421 = vmul.f32 %v1325, %v1389
        %v1422 = vmul.f32 %v1326, %v1390
        %v1423 = vmul.f32 %v1327, %v1391
        %v1424 = vmul.f32 %v1328, %v1392
        %v1425 = vmul.f32 %v1329, %v1393
        %v1426 = vmul.f32 %v1330, %v1394
        %v1427 = vmul.f32 %v1331, %v1395
        %v1428 = vmul.f32 %v1332, %v1396
        %v1429 = vmul.f32 %v1333, %v1397
        %v1430 = vmul.f32 %v1334, %v1398
        %v1431 = vmul.f32 %v1335, %v1399
        %v1432 = vmul.f32 %v1336, %v1400
        %v1433 = vmul.f32 %v1337, %v1401
        %v1434 = vmul.f32 %v1338, %v1402
        %v1435 = vmul.f32 %v1339, %v1403
        %v1436 = vmul.f32 %v1340, %v1404
        %v1437 = vmul.f32 %v1341, %v1405
        %v1438 = vmul.f32 %v1342, %v1406
        %v1439 = vmul.f32 %v1343, %v1407
        %v1440 = vmul.f32 %v1344, %v1408
        %v1441 = vmul.f32 %v1345, %v1409
        %v1442 = vmul.f32 %v1346, %v1410
        %v1443 = vmul.f32 %v1347, %v1411
        %v1444 = vmul.f32 %v1348, %v1412
        %v1445 = vld [vmem:[%s3] sm:$0x1]
        %v1447 = vlaneseq
        %v1448 = vshrl.u32 %v1447, 7
        %v1449 = vsub.s32 0, %v1448
        %v1450 = vrot.slane %v1445, %v1449
        %v1452 = vmul.f32 %v1413, %v1450
        %v1453 = vmul.f32 %v1414, %v1450
        %v1454 = vmul.f32 %v1415, %v1450
        %v1455 = vmul.f32 %v1416, %v1450
        %v1456 = vmul.f32 %v1417, %v1450
        %v1457 = vmul.f32 %v1418, %v1450
        %v1458 = vmul.f32 %v1419, %v1450
        %v1459 = vmul.f32 %v1420, %v1450
        %v1460 = vmul.f32 %v1421, %v1450
        %v1461 = vmul.f32 %v1422, %v1450
        %v1462 = vmul.f32 %v1423, %v1450
        %v1463 = vmul.f32 %v1424, %v1450
        %v1464 = vmul.f32 %v1425, %v1450
        %v1465 = vmul.f32 %v1426, %v1450
        %v1466 = vmul.f32 %v1427, %v1450
        %v1467 = vmul.f32 %v1428, %v1450
        %v1468 = vmul.f32 %v1429, %v1450
        %v1469 = vmul.f32 %v1430, %v1450
        %v1470 = vmul.f32 %v1431, %v1450
        %v1471 = vmul.f32 %v1432, %v1450
        %v1472 = vmul.f32 %v1433, %v1450
        %v1473 = vmul.f32 %v1434, %v1450
        %v1474 = vmul.f32 %v1435, %v1450
        %v1475 = vmul.f32 %v1436, %v1450
        %v1476 = vmul.f32 %v1437, %v1450
        %v1477 = vmul.f32 %v1438, %v1450
        %v1478 = vmul.f32 %v1439, %v1450
        %v1479 = vmul.f32 %v1440, %v1450
        %v1480 = vmul.f32 %v1441, %v1450
        %v1481 = vmul.f32 %v1442, %v1450
        %v1482 = vmul.f32 %v1443, %v1450
        %v1483 = vmul.f32 %v1444, %v1450
        %v1484 = vld [vmem:[%s4] sm:$0x1]
        %v1486 = vlaneseq
        %v1487 = vshrl.u32 %v1486, 7
        %v1488 = vsub.s32 0, %v1487
        %v1489 = vrot.slane %v1484, %v1488
        %v1491 = vadd.f32 %v1452, %v1489
        %v1492 = vadd.f32 %v1453, %v1489
        %v1493 = vadd.f32 %v1454, %v1489
        %v1494 = vadd.f32 %v1455, %v1489
        %v1495 = vadd.f32 %v1456, %v1489
        %v1496 = vadd.f32 %v1457, %v1489
        %v1497 = vadd.f32 %v1458, %v1489
        %v1498 = vadd.f32 %v1459, %v1489
        %v1499 = vadd.f32 %v1460, %v1489
        %v1500 = vadd.f32 %v1461, %v1489
        %v1501 = vadd.f32 %v1462, %v1489
        %v1502 = vadd.f32 %v1463, %v1489
        %v1503 = vadd.f32 %v1464, %v1489
        %v1504 = vadd.f32 %v1465, %v1489
        %v1505 = vadd.f32 %v1466, %v1489
        %v1506 = vadd.f32 %v1467, %v1489
        %v1507 = vadd.f32 %v1468, %v1489
        %v1508 = vadd.f32 %v1469, %v1489
        %v1509 = vadd.f32 %v1470, %v1489
        %v1510 = vadd.f32 %v1471, %v1489
        %v1511 = vadd.f32 %v1472, %v1489
        %v1512 = vadd.f32 %v1473, %v1489
        %v1513 = vadd.f32 %v1474, %v1489
        %v1514 = vadd.f32 %v1475, %v1489
        %v1515 = vadd.f32 %v1476, %v1489
        %v1516 = vadd.f32 %v1477, %v1489
        %v1517 = vadd.f32 %v1478, %v1489
        %v1518 = vadd.f32 %v1479, %v1489
        %v1519 = vadd.f32 %v1480, %v1489
        %v1520 = vadd.f32 %v1481, %v1489
        %v1521 = vadd.f32 %v1482, %v1489
        %v1522 = vadd.f32 %v1483, %v1489
        %v1523 = vmax.f32 %v1491, 0.0
        %v1524 = vmax.f32 %v1492, 0.0
        %v1525 = vmax.f32 %v1493, 0.0
        %v1526 = vmax.f32 %v1494, 0.0
        %v1527 = vmax.f32 %v1495, 0.0
        %v1528 = vmax.f32 %v1496, 0.0
        %v1529 = vmax.f32 %v1497, 0.0
        %v1530 = vmax.f32 %v1498, 0.0
        %v1531 = vmax.f32 %v1499, 0.0
        %v1532 = vmax.f32 %v1500, 0.0
        %v1533 = vmax.f32 %v1501, 0.0
        %v1534 = vmax.f32 %v1502, 0.0
        %v1535 = vmax.f32 %v1503, 0.0
        %v1536 = vmax.f32 %v1504, 0.0
        %v1537 = vmax.f32 %v1505, 0.0
        %v1538 = vmax.f32 %v1506, 0.0
        %v1539 = vmax.f32 %v1507, 0.0
        %v1540 = vmax.f32 %v1508, 0.0
        %v1541 = vmax.f32 %v1509, 0.0
        %v1542 = vmax.f32 %v1510, 0.0
        %v1543 = vmax.f32 %v1511, 0.0
        %v1544 = vmax.f32 %v1512, 0.0
        %v1545 = vmax.f32 %v1513, 0.0
        %v1546 = vmax.f32 %v1514, 0.0
        %v1547 = vmax.f32 %v1515, 0.0
        %v1548 = vmax.f32 %v1516, 0.0
        %v1549 = vmax.f32 %v1517, 0.0
        %v1550 = vmax.f32 %v1518, 0.0
        %v1551 = vmax.f32 %v1519, 0.0
        %v1552 = vmax.f32 %v1520, 0.0
        %v1553 = vmax.f32 %v1521, 0.0
        %v1554 = vmax.f32 %v1522, 0.0
        %v1555 = vpack.c.bf16 %v1524, %v1523
        %v1556 = vpack.c.bf16 %v1526, %v1525
        %v1557 = vpack.c.bf16 %v1528, %v1527
        %v1558 = vpack.c.bf16 %v1530, %v1529
        %v1559 = vpack.c.bf16 %v1532, %v1531
        %v1560 = vpack.c.bf16 %v1534, %v1533
        %v1561 = vpack.c.bf16 %v1536, %v1535
        %v1562 = vpack.c.bf16 %v1538, %v1537
        %v1563 = vpack.c.bf16 %v1540, %v1539
        %v1564 = vpack.c.bf16 %v1542, %v1541
        %v1565 = vpack.c.bf16 %v1544, %v1543
        %v1566 = vpack.c.bf16 %v1546, %v1545
        %v1567 = vpack.c.bf16 %v1548, %v1547
        %v1568 = vpack.c.bf16 %v1550, %v1549
        %v1569 = vpack.c.bf16 %v1552, %v1551
        %v1570 = vpack.c.bf16 %v1554, %v1553
        %v1571 = vld [vmem:[%s5] sm:$0xff]
        %v1572 = vld [vmem:[%s5 + $0x8] sm:$0xff]
        %v1573 = vld [vmem:[%s5 + $0x10] sm:$0xff]
        %v1574 = vld [vmem:[%s5 + $0x18] sm:$0xff]
        %v1575 = vld [vmem:[%s5 + $0x20] sm:$0xff]
        %v1576 = vld [vmem:[%s5 + $0x28] sm:$0xff]
        %v1577 = vld [vmem:[%s5 + $0x30] sm:$0xff]
        %v1578 = vld [vmem:[%s5 + $0x38] sm:$0xff]
        %v1579 = vld [vmem:[%s5 + $0x40] sm:$0xff]
        %v1580 = vld [vmem:[%s5 + $0x48] sm:$0xff]
        %v1581 = vld [vmem:[%s5 + $0x50] sm:$0xff]
        %v1582 = vld [vmem:[%s5 + $0x58] sm:$0xff]
        %v1583 = vld [vmem:[%s5 + $0x60] sm:$0xff]
        %v1584 = vld [vmem:[%s5 + $0x68] sm:$0xff]
        %v1585 = vld [vmem:[%s5 + $0x70] sm:$0xff]
        %v1586 = vld [vmem:[%s5 + $0x78] sm:$0xff]
        %v1603 = vunpack.c.l.b16 %v1571
        %v1604 = vunpack.c.h.b16 %v1571
        %v1605 = vunpack.c.l.b16 %v1572
        %v1606 = vunpack.c.h.b16 %v1572
        %v1607 = vunpack.c.l.b16 %v1573
        %v1608 = vunpack.c.h.b16 %v1573
        %v1609 = vunpack.c.l.b16 %v1574
        %v1610 = vunpack.c.h.b16 %v1574
        %v1611 = vunpack.c.l.b16 %v1575
        %v1612 = vunpack.c.h.b16 %v1575
        %v1613 = vunpack.c.l.b16 %v1576
        %v1614 = vunpack.c.h.b16 %v1576
        %v1615 = vunpack.c.l.b16 %v1577
        %v1616 = vunpack.c.h.b16 %v1577
        %v1617 = vunpack.c.l.b16 %v1578
        %v1618 = vunpack.c.h.b16 %v1578
        %v1619 = vunpack.c.l.b16 %v1579
        %v1620 = vunpack.c.h.b16 %v1579
        %v1621 = vunpack.c.l.b16 %v1580
        %v1622 = vunpack.c.h.b16 %v1580
        %v1623 = vunpack.c.l.b16 %v1581
        %v1624 = vunpack.c.h.b16 %v1581
        %v1625 = vunpack.c.l.b16 %v1582
        %v1626 = vunpack.c.h.b16 %v1582
        %v1627 = vunpack.c.l.b16 %v1583
        %v1628 = vunpack.c.h.b16 %v1583
        %v1629 = vunpack.c.l.b16 %v1584
        %v1630 = vunpack.c.h.b16 %v1584
        %v1631 = vunpack.c.l.b16 %v1585
        %v1632 = vunpack.c.h.b16 %v1585
        %v1633 = vunpack.c.l.b16 %v1586
        %v1634 = vunpack.c.h.b16 %v1586
        %v1635 = vpack.c.b16 %v1605, %v1603
        %v1636 = vpack.c.b16 %v1606, %v1604
        %v1637 = vpack.c.b16 %v1609, %v1607
        %v1638 = vpack.c.b16 %v1610, %v1608
        %v1639 = vpack.c.b16 %v1613, %v1611
        %v1640 = vpack.c.b16 %v1614, %v1612
        %v1641 = vpack.c.b16 %v1617, %v1615
        %v1642 = vpack.c.b16 %v1618, %v1616
        %v1643 = vpack.c.b16 %v1621, %v1619
        %v1644 = vpack.c.b16 %v1622, %v1620
        %v1645 = vpack.c.b16 %v1625, %v1623
        %v1646 = vpack.c.b16 %v1626, %v1624
        %v1647 = vpack.c.b16 %v1629, %v1627
        %v1648 = vpack.c.b16 %v1630, %v1628
        %v1649 = vpack.c.b16 %v1633, %v1631
        %v1650 = vpack.c.b16 %v1634, %v1632
        %1667 = vmatprep.subr.bf16.mxu0 %v1636
        %1668 = vmatpush1.bf16.msra.mxu0 %v1635
        %1669 = vmatprep.subr.bf16.mxu0 %v1638
        %1670 = vmatpush1.bf16.msra.mxu0 %v1637
        %1671 = vmatprep.subr.bf16.mxu0 %v1640
        %1672 = vmatpush1.bf16.msra.mxu0 %v1639
        %1673 = vmatprep.subr.bf16.mxu0 %v1642
        %1674 = vmatpush1.bf16.msra.mxu0 %v1641
        %1675 = vmatprep.subr.bf16.mxu0 %v1644
        %1676 = vmatpush1.bf16.msra.mxu0 %v1643
        %1677 = vmatprep.subr.bf16.mxu0 %v1646
        %1678 = vmatpush1.bf16.msra.mxu0 %v1645
        %1679 = vmatprep.subr.bf16.mxu0 %v1648
        %1680 = vmatpush1.bf16.msra.mxu0 %v1647
        %1681 = vmatprep.subr.bf16.mxu0 %v1650
        %1682 = vmatpush1.bf16.msra.mxu0 %v1649
        %1683 = vmatprep.subr.bf16.mxu0 0
        %1684 = vmatpush1.bf16.msra.mxu0 0
        %1685 = vmatprep.subr.bf16.mxu0 0
        %1686 = vmatpush1.bf16.msra.mxu0 0
        %1687 = vmatprep.subr.bf16.mxu0 0
        %1688 = vmatpush1.bf16.msra.mxu0 0
        %1689 = vmatprep.subr.bf16.mxu0 0
        %1690 = vmatpush1.bf16.msra.mxu0 0
        %1691 = vmatprep.subr.bf16.mxu0 0
        %1692 = vmatpush1.bf16.msra.mxu0 0
        %1693 = vmatprep.subr.bf16.mxu0 0
        %1694 = vmatpush1.bf16.msra.mxu0 0
        %1695 = vmatprep.subr.bf16.mxu0 0
        %1696 = vmatpush1.bf16.msra.mxu0 0
        %1697 = vmatprep.subr.bf16.mxu0 0
        %1698 = vmatpush1.bf16.msra.mxu0 0
        %1699 = vmatprep.mubr.bf16.mxu0 0
        %1700 = vmatmul.mubr.bf16.gmra.mrb[0].mxu0 %v1555
        %v1701 = vpop.f32.mrb[0].mxu0
        %v1702 = vadd.f32 0.0, %v1701
        %v1703 = vpop.f32.mrb[0].mxu0
        %v1704 = vadd.f32 0.0, %v1703
        %v1705 = vpop.f32.mrb[0].mxu0
        %v1706 = vadd.f32 0.0, %v1705
        %v1707 = vpop.f32.mrb[0].mxu0
        %v1708 = vadd.f32 0.0, %v1707
        %1709 = vmatprep.mubr.bf16.mxu0 0
        %1710 = vmatmul.mubr.bf16.gmra.mrb[0].mxu0 %v1556
        %v1711 = vpop.f32.mrb[0].mxu0
        %v1712 = vadd.f32 0.0, %v1711
        %v1713 = vpop.f32.mrb[0].mxu0
        %v1714 = vadd.f32 0.0, %v1713
        %v1715 = vpop.f32.mrb[0].mxu0
        %v1716 = vadd.f32 0.0, %v1715
        %v1717 = vpop.f32.mrb[0].mxu0
        %v1718 = vadd.f32 0.0, %v1717
        %1719 = vmatprep.mubr.bf16.mxu0 0
        %1720 = vmatmul.mubr.bf16.gmra.mrb[0].mxu0 %v1557
        %v1721 = vpop.f32.mrb[0].mxu0
        %v1722 = vadd.f32 0.0, %v1721
        %v1723 = vpop.f32.mrb[0].mxu0
        %v1724 = vadd.f32 0.0, %v1723
        %v1725 = vpop.f32.mrb[0].mxu0
        %v1726 = vadd.f32 0.0, %v1725
        %v1727 = vpop.f32.mrb[0].mxu0
        %v1728 = vadd.f32 0.0, %v1727
        %1729 = vmatprep.mubr.bf16.mxu0 0
        %1730 = vmatmul.mubr.bf16.gmra.mrb[0].mxu0 %v1558
        %v1731 = vpop.f32.mrb[0].mxu0
        %v1732 = vadd.f32 0.0, %v1731
        %v1733 = vpop.f32.mrb[0].mxu0
        %v1734 = vadd.f32 0.0, %v1733
        %v1735 = vpop.f32.mrb[0].mxu0
        %v1736 = vadd.f32 0.0, %v1735
        %v1737 = vpop.f32.mrb[0].mxu0
        %v1738 = vadd.f32 0.0, %v1737
        %1739 = vmatprep.mubr.bf16.mxu0 0
        %1740 = vmatmul.mubr.bf16.gmra.mrb[0].mxu0 %v1559
        %v1741 = vpop.f32.mrb[0].mxu0
        %v1742 = vadd.f32 0.0, %v1741
        %v1743 = vpop.f32.mrb[0].mxu0
        %v1744 = vadd.f32 0.0, %v1743
        %v1745 = vpop.f32.mrb[0].mxu0
        %v1746 = vadd.f32 0.0, %v1745
        %v1747 = vpop.f32.mrb[0].mxu0
        %v1748 = vadd.f32 0.0, %v1747
        %1749 = vmatprep.mubr.bf16.mxu0 0
        %1750 = vmatmul.mubr.bf16.gmra.mrb[0].mxu0 %v1560
        %v1751 = vpop.f32.mrb[0].mxu0
        %v1752 = vadd.f32 0.0, %v1751
        %v1753 = vpop.f32.mrb[0].mxu0
        %v1754 = vadd.f32 0.0, %v1753
        %v1755 = vpop.f32.mrb[0].mxu0
        %v1756 = vadd.f32 0.0, %v1755
        %v1757 = vpop.f32.mrb[0].mxu0
        %v1758 = vadd.f32 0.0, %v1757
        %1759 = vmatprep.mubr.bf16.mxu0 0
        %1760 = vmatmul.mubr.bf16.gmra.mrb[0].mxu0 %v1561
        %v1761 = vpop.f32.mrb[0].mxu0
        %v1762 = vadd.f32 0.0, %v1761
        %v1763 = vpop.f32.mrb[0].mxu0
        %v1764 = vadd.f32 0.0, %v1763
        %v1765 = vpop.f32.mrb[0].mxu0
        %v1766 = vadd.f32 0.0, %v1765
        %v1767 = vpop.f32.mrb[0].mxu0
        %v1768 = vadd.f32 0.0, %v1767
        %1769 = vmatprep.mubr.bf16.mxu0 0
        %1770 = vmatmul.mubr.bf16.gmra.mrb[0].mxu0 %v1562
        %v1771 = vpop.f32.mrb[0].mxu0
        %v1772 = vadd.f32 0.0, %v1771
        %v1773 = vpop.f32.mrb[0].mxu0
        %v1774 = vadd.f32 0.0, %v1773
        %v1775 = vpop.f32.mrb[0].mxu0
        %v1776 = vadd.f32 0.0, %v1775
        %v1777 = vpop.f32.mrb[0].mxu0
        %v1778 = vadd.f32 0.0, %v1777
        %1779 = vmatprep.mubr.bf16.mxu0 0
        %1780 = vmatmul.mubr.bf16.gmra.mrb[0].mxu0 %v1563
        %v1781 = vpop.f32.mrb[0].mxu0
        %v1782 = vadd.f32 0.0, %v1781
        %v1783 = vpop.f32.mrb[0].mxu0
        %v1784 = vadd.f32 0.0, %v1783
        %v1785 = vpop.f32.mrb[0].mxu0
        %v1786 = vadd.f32 0.0, %v1785
        %v1787 = vpop.f32.mrb[0].mxu0
        %v1788 = vadd.f32 0.0, %v1787
        %1789 = vmatprep.mubr.bf16.mxu0 0
        %1790 = vmatmul.mubr.bf16.gmra.mrb[0].mxu0 %v1564
        %v1791 = vpop.f32.mrb[0].mxu0
        %v1792 = vadd.f32 0.0, %v1791
        %v1793 = vpop.f32.mrb[0].mxu0
        %v1794 = vadd.f32 0.0, %v1793
        %v1795 = vpop.f32.mrb[0].mxu0
        %v1796 = vadd.f32 0.0, %v1795
        %v1797 = vpop.f32.mrb[0].mxu0
        %v1798 = vadd.f32 0.0, %v1797
        %1799 = vmatprep.mubr.bf16.mxu0 0
        %1800 = vmatmul.mubr.bf16.gmra.mrb[0].mxu0 %v1565
        %v1801 = vpop.f32.mrb[0].mxu0
        %v1802 = vadd.f32 0.0, %v1801
        %v1803 = vpop.f32.mrb[0].mxu0
        %v1804 = vadd.f32 0.0, %v1803
        %v1805 = vpop.f32.mrb[0].mxu0
        %v1806 = vadd.f32 0.0, %v1805
        %v1807 = vpop.f32.mrb[0].mxu0
        %v1808 = vadd.f32 0.0, %v1807
        %1809 = vmatprep.mubr.bf16.mxu0 0
        %1810 = vmatmul.mubr.bf16.gmra.mrb[0].mxu0 %v1566
        %v1811 = vpop.f32.mrb[0].mxu0
        %v1812 = vadd.f32 0.0, %v1811
        %v1813 = vpop.f32.mrb[0].mxu0
        %v1814 = vadd.f32 0.0, %v1813
        %v1815 = vpop.f32.mrb[0].mxu0
        %v1816 = vadd.f32 0.0, %v1815
        %v1817 = vpop.f32.mrb[0].mxu0
        %v1818 = vadd.f32 0.0, %v1817
        %1819 = vmatprep.mubr.bf16.mxu0 0
        %1820 = vmatmul.mubr.bf16.gmra.mrb[0].mxu0 %v1567
        %v1821 = vpop.f32.mrb[0].mxu0
        %v1822 = vadd.f32 0.0, %v1821
        %v1823 = vpop.f32.mrb[0].mxu0
        %v1824 = vadd.f32 0.0, %v1823
        %v1825 = vpop.f32.mrb[0].mxu0
        %v1826 = vadd.f32 0.0, %v1825
        %v1827 = vpop.f32.mrb[0].mxu0
        %v1828 = vadd.f32 0.0, %v1827
        %1829 = vmatprep.mubr.bf16.mxu0 0
        %1830 = vmatmul.mubr.bf16.gmra.mrb[0].mxu0 %v1568
        %v1831 = vpop.f32.mrb[0].mxu0
        %v1832 = vadd.f32 0.0, %v1831
        %v1833 = vpop.f32.mrb[0].mxu0
        %v1834 = vadd.f32 0.0, %v1833
        %v1835 = vpop.f32.mrb[0].mxu0
        %v1836 = vadd.f32 0.0, %v1835
        %v1837 = vpop.f32.mrb[0].mxu0
        %v1838 = vadd.f32 0.0, %v1837
        %1839 = vmatprep.mubr.bf16.mxu0 0
        %1840 = vmatmul.mubr.bf16.gmra.mrb[0].mxu0 %v1569
        %v1841 = vpop.f32.mrb[0].mxu0
        %v1842 = vadd.f32 0.0, %v1841
        %v1843 = vpop.f32.mrb[0].mxu0
        %v1844 = vadd.f32 0.0, %v1843
        %v1845 = vpop.f32.mrb[0].mxu0
        %v1846 = vadd.f32 0.0, %v1845
        %v1847 = vpop.f32.mrb[0].mxu0
        %v1848 = vadd.f32 0.0, %v1847
        %1849 = vmatprep.mubr.bf16.mxu0 0
        %1850 = vmatmul.mubr.bf16.gmra.mrb[0].mxu0 %v1570
        %v1851 = vpop.f32.mrb[0].mxu0
        %v1852 = vadd.f32 0.0, %v1851
        %v1853 = vpop.f32.mrb[0].mxu0
        %v1854 = vadd.f32 0.0, %v1853
        %v1855 = vpop.f32.mrb[0].mxu0
        %v1856 = vadd.f32 0.0, %v1855
        %v1857 = vpop.f32.mrb[0].mxu0
        %v1858 = vadd.f32 0.0, %v1857
        %1859 = vdwg.mxu0
        %v1860 = vmul.f32 %v1702, %v1702
        %v1861 = vmul.f32 %v1706, %v1706
        %v1862 = vmul.f32 %v1712, %v1712
        %v1863 = vmul.f32 %v1716, %v1716
        %v1864 = vmul.f32 %v1722, %v1722
        %v1865 = vmul.f32 %v1726, %v1726
        %v1866 = vmul.f32 %v1732, %v1732
        %v1867 = vmul.f32 %v1736, %v1736
        %v1868 = vmul.f32 %v1742, %v1742
        %v1869 = vmul.f32 %v1746, %v1746
        %v1870 = vmul.f32 %v1752, %v1752
        %v1871 = vmul.f32 %v1756, %v1756
        %v1872 = vmul.f32 %v1762, %v1762
        %v1873 = vmul.f32 %v1766, %v1766
        %v1874 = vmul.f32 %v1772, %v1772
        %v1875 = vmul.f32 %v1776, %v1776
        %v1876 = vmul.f32 %v1782, %v1782
        %v1877 = vmul.f32 %v1786, %v1786
        %v1878 = vmul.f32 %v1792, %v1792
        %v1879 = vmul.f32 %v1796, %v1796
        %v1880 = vmul.f32 %v1802, %v1802
        %v1881 = vmul.f32 %v1806, %v1806
        %v1882 = vmul.f32 %v1812, %v1812
        %v1883 = vmul.f32 %v1816, %v1816
        %v1884 = vmul.f32 %v1822, %v1822
        %v1885 = vmul.f32 %v1826, %v1826
        %v1886 = vmul.f32 %v1832, %v1832
        %v1887 = vmul.f32 %v1836, %v1836
        %v1888 = vmul.f32 %v1842, %v1842
        %v1889 = vmul.f32 %v1846, %v1846
        %v1890 = vmul.f32 %v1852, %v1852
        %v1891 = vmul.f32 %v1856, %v1856
        %v1892 = vld [vmem:[%s6] sm:$0xff]
        %v1893 = vld [vmem:[%s6 + $0x8] sm:$0xff]
        %v1894 = vld [vmem:[%s6 + $0x10] sm:$0xff]
        %v1895 = vld [vmem:[%s6 + $0x18] sm:$0xff]
        %v1896 = vld [vmem:[%s6 + $0x20] sm:$0xff]
        %v1897 = vld [vmem:[%s6 + $0x28] sm:$0xff]
        %v1898 = vld [vmem:[%s6 + $0x30] sm:$0xff]
        %v1899 = vld [vmem:[%s6 + $0x38] sm:$0xff]
        %v1900 = vld [vmem:[%s6 + $0x40] sm:$0xff]
        %v1901 = vld [vmem:[%s6 + $0x48] sm:$0xff]
        %v1902 = vld [vmem:[%s6 + $0x50] sm:$0xff]
        %v1903 = vld [vmem:[%s6 + $0x58] sm:$0xff]
        %v1904 = vld [vmem:[%s6 + $0x60] sm:$0xff]
        %v1905 = vld [vmem:[%s6 + $0x68] sm:$0xff]
        %v1906 = vld [vmem:[%s6 + $0x70] sm:$0xff]
        %v1907 = vld [vmem:[%s6 + $0x78] sm:$0xff]
        %1908 = vmatprep.subr.mxu0 0.0
        %1909 = vmatpush1.msra.mxu0 %v1892
        %1910 = vmatprep.subr.mxu0 0.0
        %1911 = vmatpush1.msra.mxu0 %v1893
        %1912 = vmatprep.subr.mxu0 0.0
        %1913 = vmatpush1.msra.mxu0 %v1894
        %1914 = vmatprep.subr.mxu0 0.0
        %1915 = vmatpush1.msra.mxu0 %v1895
        %1916 = vmatprep.subr.mxu0 0.0
        %1917 = vmatpush1.msra.mxu0 %v1896
        %1918 = vmatprep.subr.mxu0 0.0
        %1919 = vmatpush1.msra.mxu0 %v1897
        %1920 = vmatprep.subr.mxu0 0.0
        %1921 = vmatpush1.msra.mxu0 %v1898
        %1922 = vmatprep.subr.mxu0 0.0
        %1923 = vmatpush1.msra.mxu0 %v1899
        %1924 = vmatprep.subr.mxu0 0.0
        %1925 = vmatpush1.msra.mxu0 %v1900
        %1926 = vmatprep.subr.mxu0 0.0
        %1927 = vmatpush1.msra.mxu0 %v1901
        %1928 = vmatprep.subr.mxu0 0.0
        %1929 = vmatpush1.msra.mxu0 %v1902
        %1930 = vmatprep.subr.mxu0 0.0
        %1931 = vmatpush1.msra.mxu0 %v1903
        %1932 = vmatprep.subr.mxu0 0.0
        %1933 = vmatpush1.msra.mxu0 %v1904
        %1934 = vmatprep.subr.mxu0 0.0
        %1935 = vmatpush1.msra.mxu0 %v1905
        %1936 = vmatprep.subr.mxu0 0.0
        %1937 = vmatpush1.msra.mxu0 %v1906
        %1938 = vmatprep.subr.mxu0 0.0
        %1939 = vmatpush1.msra.mxu0 %v1907
        %1940 = vmatprep.subr.mxu0 0.0
        %1941 = vmatpush1.msra.mxu0 0.0
        %1942 = vmatprep.subr.mxu0 0.0
        %1943 = vmatpush1.msra.mxu0 0.0
        %1944 = vmatprep.subr.mxu0 0.0
        %1945 = vmatpush1.msra.mxu0 0.0
        %1946 = vmatprep.subr.mxu0 0.0
        %1947 = vmatpush1.msra.mxu0 0.0
        %1948 = vmatprep.subr.mxu0 0.0
        %1949 = vmatpush1.msra.mxu0 0.0
        %1950 = vmatprep.subr.mxu0 0.0
        %1951 = vmatpush1.msra.mxu0 0.0
        %1952 = vmatprep.subr.mxu0 0.0
        %1953 = vmatpush1.msra.mxu0 0.0
        %1954 = vmatprep.subr.mxu0 0.0
        %1955 = vmatpush1.msra.mxu0 0.0
        %1956 = vmatprep.subr.mxu0 0.0
        %1957 = vmatpush1.msra.mxu0 0.0
        %1958 = vmatprep.subr.mxu0 0.0
        %1959 = vmatpush1.msra.mxu0 0.0
        %1960 = vmatprep.subr.mxu0 0.0
        %1961 = vmatpush1.msra.mxu0 0.0
        %1962 = vmatprep.subr.mxu0 0.0
        %1963 = vmatpush1.msra.mxu0 0.0
        %1964 = vmatprep.subr.mxu0 0.0
        %1965 = vmatpush1.msra.mxu0 0.0
        %1966 = vmatprep.subr.mxu0 0.0
        %1967 = vmatpush1.msra.mxu0 0.0
        %1968 = vmatprep.subr.mxu0 0.0
        %1969 = vmatpush1.msra.mxu0 0.0
        %1970 = vmatprep.subr.mxu0 0.0
        %1971 = vmatpush1.msra.mxu0 0.0
        %1972 = vmatprep.mubr.f32.mxu0 0.0
        %1973 = vmatmul.mubr.f32.gmra.mrb[0].mxu0 %v1860
        %v1974 = vpop.f32.mrb[0].mxu0
        %v1975 = vadd.f32 0.0, %v1974
        %v1976 = vpop.f32.mrb[0].mxu0
        %1977 = vmatprep.mubr.f32.mxu0 0.0
        %1978 = vmatmul.mubr.f32.gmra.mrb[0].mxu0 %v1861
        %v1979 = vpop.f32.mrb[0].mxu0
        %v1980 = vadd.f32 0.0, %v1979
        %v1981 = vpop.f32.mrb[0].mxu0
        %1982 = vmatprep.mubr.f32.mxu0 0.0
        %1983 = vmatmul.mubr.f32.gmra.mrb[0].mxu0 %v1862
        %v1984 = vpop.f32.mrb[0].mxu0
        %v1985 = vadd.f32 0.0, %v1984
        %v1986 = vpop.f32.mrb[0].mxu0
        %1987 = vmatprep.mubr.f32.mxu0 0.0
        %1988 = vmatmul.mubr.f32.gmra.mrb[0].mxu0 %v1863
        %v1989 = vpop.f32.mrb[0].mxu0
        %v1990 = vadd.f32 0.0, %v1989
        %v1991 = vpop.f32.mrb[0].mxu0
        %1992 = vmatprep.mubr.f32.mxu0 0.0
        %1993 = vmatmul.mubr.f32.gmra.mrb[0].mxu0 %v1864
        %v1994 = vpop.f32.mrb[0].mxu0
        %v1995 = vadd.f32 0.0, %v1994
        %v1996 = vpop.f32.mrb[0].mxu0
        %1997 = vmatprep.mubr.f32.mxu0 0.0
        %1998 = vmatmul.mubr.f32.gmra.mrb[0].mxu0 %v1865
        %v1999 = vpop.f32.mrb[0].mxu0
        %v2000 = vadd.f32 0.0, %v1999
        %v2001 = vpop.f32.mrb[0].mxu0
        %2002 = vmatprep.mubr.f32.mxu0 0.0
        %2003 = vmatmul.mubr.f32.gmra.mrb[0].mxu0 %v1866
        %v2004 = vpop.f32.mrb[0].mxu0
        %v2005 = vadd.f32 0.0, %v2004
        %v2006 = vpop.f32.mrb[0].mxu0
        %2007 = vmatprep.mubr.f32.mxu0 0.0
        %2008 = vmatmul.mubr.f32.gmra.mrb[0].mxu0 %v1867
        %v2009 = vpop.f32.mrb[0].mxu0
        %v2010 = vadd.f32 0.0, %v2009
        %v2011 = vpop.f32.mrb[0].mxu0
        %2012 = vmatprep.mubr.f32.mxu0 0.0
        %2013 = vmatmul.mubr.f32.gmra.mrb[0].mxu0 %v1868
        %v2014 = vpop.f32.mrb[0].mxu0
        %v2015 = vadd.f32 0.0, %v2014
        %v2016 = vpop.f32.mrb[0].mxu0
        %2017 = vmatprep.mubr.f32.mxu0 0.0
        %2018 = vmatmul.mubr.f32.gmra.mrb[0].mxu0 %v1869
        %v2019 = vpop.f32.mrb[0].mxu0
        %v2020 = vadd.f32 0.0, %v2019
        %v2021 = vpop.f32.mrb[0].mxu0
        %2022 = vmatprep.mubr.f32.mxu0 0.0
        %2023 = vmatmul.mubr.f32.gmra.mrb[0].mxu0 %v1870
        %v2024 = vpop.f32.mrb[0].mxu0
        %v2025 = vadd.f32 0.0, %v2024
        %v2026 = vpop.f32.mrb[0].mxu0
        %2027 = vmatprep.mubr.f32.mxu0 0.0
        %2028 = vmatmul.mubr.f32.gmra.mrb[0].mxu0 %v1871
        %v2029 = vpop.f32.mrb[0].mxu0
        %v2030 = vadd.f32 0.0, %v2029
        %v2031 = vpop.f32.mrb[0].mxu0
        %2032 = vmatprep.mubr.f32.mxu0 0.0
        %2033 = vmatmul.mubr.f32.gmra.mrb[0].mxu0 %v1872
        %v2034 = vpop.f32.mrb[0].mxu0
        %v2035 = vadd.f32 0.0, %v2034
        %v2036 = vpop.f32.mrb[0].mxu0
        %2037 = vmatprep.mubr.f32.mxu0 0.0
        %2038 = vmatmul.mubr.f32.gmra.mrb[0].mxu0 %v1873
        %v2039 = vpop.f32.mrb[0].mxu0
        %v2040 = vadd.f32 0.0, %v2039
        %v2041 = vpop.f32.mrb[0].mxu0
        %2042 = vmatprep.mubr.f32.mxu0 0.0
        %2043 = vmatmul.mubr.f32.gmra.mrb[0].mxu0 %v1874
        %v2044 = vpop.f32.mrb[0].mxu0
        %v2045 = vadd.f32 0.0, %v2044
        %v2046 = vpop.f32.mrb[0].mxu0
        %2047 = vmatprep.mubr.f32.mxu0 0.0
        %2048 = vmatmul.mubr.f32.gmra.mrb[0].mxu0 %v1875
        %v2049 = vpop.f32.mrb[0].mxu0
        %v2050 = vadd.f32 0.0, %v2049
        %v2051 = vpop.f32.mrb[0].mxu0
        %2052 = vmatprep.mubr.f32.mxu0 0.0
        %2053 = vmatmul.mubr.f32.gmra.mrb[0].mxu0 %v1876
        %v2054 = vpop.f32.mrb[0].mxu0
        %v2055 = vadd.f32 0.0, %v2054
        %v2056 = vpop.f32.mrb[0].mxu0
        %2057 = vmatprep.mubr.f32.mxu0 0.0
        %2058 = vmatmul.mubr.f32.gmra.mrb[0].mxu0 %v1877
        %v2059 = vpop.f32.mrb[0].mxu0
        %v2060 = vadd.f32 0.0, %v2059
        %v2061 = vpop.f32.mrb[0].mxu0
        %2062 = vmatprep.mubr.f32.mxu0 0.0
        %2063 = vmatmul.mubr.f32.gmra.mrb[0].mxu0 %v1878
        %v2064 = vpop.f32.mrb[0].mxu0
        %v2065 = vadd.f32 0.0, %v2064
        %v2066 = vpop.f32.mrb[0].mxu0
        %2067 = vmatprep.mubr.f32.mxu0 0.0
        %2068 = vmatmul.mubr.f32.gmra.mrb[0].mxu0 %v1879
        %v2069 = vpop.f32.mrb[0].mxu0
        %v2070 = vadd.f32 0.0, %v2069
        %v2071 = vpop.f32.mrb[0].mxu0
        %2072 = vmatprep.mubr.f32.mxu0 0.0
        %2073 = vmatmul.mubr.f32.gmra.mrb[0].mxu0 %v1880
        %v2074 = vpop.f32.mrb[0].mxu0
        %v2075 = vadd.f32 0.0, %v2074
        %v2076 = vpop.f32.mrb[0].mxu0
        %2077 = vmatprep.mubr.f32.mxu0 0.0
        %2078 = vmatmul.mubr.f32.gmra.mrb[0].mxu0 %v1881
        %v2079 = vpop.f32.mrb[0].mxu0
        %v2080 = vadd.f32 0.0, %v2079
        %v2081 = vpop.f32.mrb[0].mxu0
        %2082 = vmatprep.mubr.f32.mxu0 0.0
        %2083 = vmatmul.mubr.f32.gmra.mrb[0].mxu0 %v1882
        %v2084 = vpop.f32.mrb[0].mxu0
        %v2085 = vadd.f32 0.0, %v2084
        %v2086 = vpop.f32.mrb[0].mxu0
        %2087 = vmatprep.mubr.f32.mxu0 0.0
        %2088 = vmatmul.mubr.f32.gmra.mrb[0].mxu0 %v1883
        %v2089 = vpop.f32.mrb[0].mxu0
        %v2090 = vadd.f32 0.0, %v2089
        %v2091 = vpop.f32.mrb[0].mxu0
        %2092 = vmatprep.mubr.f32.mxu0 0.0
        %2093 = vmatmul.mubr.f32.gmra.mrb[0].mxu0 %v1884
        %v2094 = vpop.f32.mrb[0].mxu0
        %v2095 = vadd.f32 0.0, %v2094
        %v2096 = vpop.f32.mrb[0].mxu0
        %2097 = vmatprep.mubr.f32.mxu0 0.0
        %2098 = vmatmul.mubr.f32.gmra.mrb[0].mxu0 %v1885
        %v2099 = vpop.f32.mrb[0].mxu0
        %v2100 = vadd.f32 0.0, %v2099
        %v2101 = vpop.f32.mrb[0].mxu0
        %2102 = vmatprep.mubr.f32.mxu0 0.0
        %2103 = vmatmul.mubr.f32.gmra.mrb[0].mxu0 %v1886
        %v2104 = vpop.f32.mrb[0].mxu0
        %v2105 = vadd.f32 0.0, %v2104
        %v2106 = vpop.f32.mrb[0].mxu0
        %2107 = vmatprep.mubr.f32.mxu0 0.0
        %2108 = vmatmul.mubr.f32.gmra.mrb[0].mxu0 %v1887
        %v2109 = vpop.f32.mrb[0].mxu0
        %v2110 = vadd.f32 0.0, %v2109
        %v2111 = vpop.f32.mrb[0].mxu0
        %2112 = vmatprep.mubr.f32.mxu0 0.0
        %2113 = vmatmul.mubr.f32.gmra.mrb[0].mxu0 %v1888
        %v2114 = vpop.f32.mrb[0].mxu0
        %v2115 = vadd.f32 0.0, %v2114
        %v2116 = vpop.f32.mrb[0].mxu0
        %2117 = vmatprep.mubr.f32.mxu0 0.0
        %2118 = vmatmul.mubr.f32.gmra.mrb[0].mxu0 %v1889
        %v2119 = vpop.f32.mrb[0].mxu0
        %v2120 = vadd.f32 0.0, %v2119
        %v2121 = vpop.f32.mrb[0].mxu0
        %2122 = vmatprep.mubr.f32.mxu0 0.0
        %2123 = vmatmul.mubr.f32.gmra.mrb[0].mxu0 %v1890
        %v2124 = vpop.f32.mrb[0].mxu0
        %v2125 = vadd.f32 0.0, %v2124
        %v2126 = vpop.f32.mrb[0].mxu0
        %2127 = vmatprep.mubr.f32.mxu0 0.0
        %2128 = vmatmul.mubr.f32.gmra.mrb[0].mxu0 %v1891
        %v2129 = vpop.f32.mrb[0].mxu0
        %v2130 = vadd.f32 0.0, %v2129
        %v2131 = vpop.f32.mrb[0].mxu0
        %2132 = vdwg.mxu0
        %v2133 = vmul.f32 %v1704, %v1704
        %v2134 = vmul.f32 %v1708, %v1708
        %v2135 = vmul.f32 %v1714, %v1714
        %v2136 = vmul.f32 %v1718, %v1718
        %v2137 = vmul.f32 %v1724, %v1724
        %v2138 = vmul.f32 %v1728, %v1728
        %v2139 = vmul.f32 %v1734, %v1734
        %v2140 = vmul.f32 %v1738, %v1738
        %v2141 = vmul.f32 %v1744, %v1744
        %v2142 = vmul.f32 %v1748, %v1748
        %v2143 = vmul.f32 %v1754, %v1754
        %v2144 = vmul.f32 %v1758, %v1758
        %v2145 = vmul.f32 %v1764, %v1764
        %v2146 = vmul.f32 %v1768, %v1768
        %v2147 = vmul.f32 %v1774, %v1774
        %v2148 = vmul.f32 %v1778, %v1778
        %v2149 = vmul.f32 %v1784, %v1784
        %v2150 = vmul.f32 %v1788, %v1788
        %v2151 = vmul.f32 %v1794, %v1794
        %v2152 = vmul.f32 %v1798, %v1798
        %v2153 = vmul.f32 %v1804, %v1804
        %v2154 = vmul.f32 %v1808, %v1808
        %v2155 = vmul.f32 %v1814, %v1814
        %v2156 = vmul.f32 %v1818, %v1818
        %v2157 = vmul.f32 %v1824, %v1824
        %v2158 = vmul.f32 %v1828, %v1828
        %v2159 = vmul.f32 %v1834, %v1834
        %v2160 = vmul.f32 %v1838, %v1838
        %v2161 = vmul.f32 %v1844, %v1844
        %v2162 = vmul.f32 %v1848, %v1848
        %v2163 = vmul.f32 %v1854, %v1854
        %v2164 = vmul.f32 %v1858, %v1858
        %v2165 = vsub.f32 %v1975, %v2133
        %v2166 = vsub.f32 %v1980, %v2134
        %v2167 = vsub.f32 %v1985, %v2135
        %v2168 = vsub.f32 %v1990, %v2136
        %v2169 = vsub.f32 %v1995, %v2137
        %v2170 = vsub.f32 %v2000, %v2138
        %v2171 = vsub.f32 %v2005, %v2139
        %v2172 = vsub.f32 %v2010, %v2140
        %v2173 = vsub.f32 %v2015, %v2141
        %v2174 = vsub.f32 %v2020, %v2142
        %v2175 = vsub.f32 %v2025, %v2143
        %v2176 = vsub.f32 %v2030, %v2144
        %v2177 = vsub.f32 %v2035, %v2145
        %v2178 = vsub.f32 %v2040, %v2146
        %v2179 = vsub.f32 %v2045, %v2147
        %v2180 = vsub.f32 %v2050, %v2148
        %v2181 = vsub.f32 %v2055, %v2149
        %v2182 = vsub.f32 %v2060, %v2150
        %v2183 = vsub.f32 %v2065, %v2151
        %v2184 = vsub.f32 %v2070, %v2152
        %v2185 = vsub.f32 %v2075, %v2153
        %v2186 = vsub.f32 %v2080, %v2154
        %v2187 = vsub.f32 %v2085, %v2155
        %v2188 = vsub.f32 %v2090, %v2156
        %v2189 = vsub.f32 %v2095, %v2157
        %v2190 = vsub.f32 %v2100, %v2158
        %v2191 = vsub.f32 %v2105, %v2159
        %v2192 = vsub.f32 %v2110, %v2160
        %v2193 = vsub.f32 %v2115, %v2161
        %v2194 = vsub.f32 %v2120, %v2162
        %v2195 = vsub.f32 %v2125, %v2163
        %v2196 = vsub.f32 %v2130, %v2164
        %v2197 = vmax.f32 %v2165, 0.0
        %v2198 = vmax.f32 %v2166, 0.0
        %v2199 = vmax.f32 %v2167, 0.0
        %v2200 = vmax.f32 %v2168, 0.0
        %v2201 = vmax.f32 %v2169, 0.0
        %v2202 = vmax.f32 %v2170, 0.0
        %v2203 = vmax.f32 %v2171, 0.0
        %v2204 = vmax.f32 %v2172, 0.0
        %v2205 = vmax.f32 %v2173, 0.0
        %v2206 = vmax.f32 %v2174, 0.0
        %v2207 = vmax.f32 %v2175, 0.0
        %v2208 = vmax.f32 %v2176, 0.0
        %v2209 = vmax.f32 %v2177, 0.0
        %v2210 = vmax.f32 %v2178, 0.0
        %v2211 = vmax.f32 %v2179, 0.0
        %v2212 = vmax.f32 %v2180, 0.0
        %v2213 = vmax.f32 %v2181, 0.0
        %v2214 = vmax.f32 %v2182, 0.0
        %v2215 = vmax.f32 %v2183, 0.0
        %v2216 = vmax.f32 %v2184, 0.0
        %v2217 = vmax.f32 %v2185, 0.0
        %v2218 = vmax.f32 %v2186, 0.0
        %v2219 = vmax.f32 %v2187, 0.0
        %v2220 = vmax.f32 %v2188, 0.0
        %v2221 = vmax.f32 %v2189, 0.0
        %v2222 = vmax.f32 %v2190, 0.0
        %v2223 = vmax.f32 %v2191, 0.0
        %v2224 = vmax.f32 %v2192, 0.0
        %v2225 = vmax.f32 %v2193, 0.0
        %v2226 = vmax.f32 %v2194, 0.0
        %v2227 = vmax.f32 %v2195, 0.0
        %v2228 = vmax.f32 %v2196, 0.0
        %v2229 = vsub.f32 %v1702, %v1704
        %v2230 = vsub.f32 %v1706, %v1708
        %v2231 = vsub.f32 %v1712, %v1714
        %v2232 = vsub.f32 %v1716, %v1718
        %v2233 = vsub.f32 %v1722, %v1724
        %v2234 = vsub.f32 %v1726, %v1728
        %v2235 = vsub.f32 %v1732, %v1734
        %v2236 = vsub.f32 %v1736, %v1738
        %v2237 = vsub.f32 %v1742, %v1744
        %v2238 = vsub.f32 %v1746, %v1748
        %v2239 = vsub.f32 %v1752, %v1754
        %v2240 = vsub.f32 %v1756, %v1758
        %v2241 = vsub.f32 %v1762, %v1764
        %v2242 = vsub.f32 %v1766, %v1768
        %v2243 = vsub.f32 %v1772, %v1774
        %v2244 = vsub.f32 %v1776, %v1778
        %v2245 = vsub.f32 %v1782, %v1784
        %v2246 = vsub.f32 %v1786, %v1788
        %v2247 = vsub.f32 %v1792, %v1794
        %v2248 = vsub.f32 %v1796, %v1798
        %v2249 = vsub.f32 %v1802, %v1804
        %v2250 = vsub.f32 %v1806, %v1808
        %v2251 = vsub.f32 %v1812, %v1814
        %v2252 = vsub.f32 %v1816, %v1818
        %v2253 = vsub.f32 %v1822, %v1824
        %v2254 = vsub.f32 %v1826, %v1828
        %v2255 = vsub.f32 %v1832, %v1834
        %v2256 = vsub.f32 %v1836, %v1838
        %v2257 = vsub.f32 %v1842, %v1844
        %v2258 = vsub.f32 %v1846, %v1848
        %v2259 = vsub.f32 %v1852, %v1854
        %v2260 = vsub.f32 %v1856, %v1858
        %v2261 = vadd.f32 %v2197, 1e-05
        %v2262 = vadd.f32 %v2198, 1e-05
        %v2263 = vadd.f32 %v2199, 1e-05
        %v2264 = vadd.f32 %v2200, 1e-05
        %v2265 = vadd.f32 %v2201, 1e-05
        %v2266 = vadd.f32 %v2202, 1e-05
        %v2267 = vadd.f32 %v2203, 1e-05
        %v2268 = vadd.f32 %v2204, 1e-05
        %v2269 = vadd.f32 %v2205, 1e-05
        %v2270 = vadd.f32 %v2206, 1e-05
        %v2271 = vadd.f32 %v2207, 1e-05
        %v2272 = vadd.f32 %v2208, 1e-05
        %v2273 = vadd.f32 %v2209, 1e-05
        %v2274 = vadd.f32 %v2210, 1e-05
        %v2275 = vadd.f32 %v2211, 1e-05
        %v2276 = vadd.f32 %v2212, 1e-05
        %v2277 = vadd.f32 %v2213, 1e-05
        %v2278 = vadd.f32 %v2214, 1e-05
        %v2279 = vadd.f32 %v2215, 1e-05
        %v2280 = vadd.f32 %v2216, 1e-05
        %v2281 = vadd.f32 %v2217, 1e-05
        %v2282 = vadd.f32 %v2218, 1e-05
        %v2283 = vadd.f32 %v2219, 1e-05
        %v2284 = vadd.f32 %v2220, 1e-05
        %v2285 = vadd.f32 %v2221, 1e-05
        %v2286 = vadd.f32 %v2222, 1e-05
        %v2287 = vadd.f32 %v2223, 1e-05
        %v2288 = vadd.f32 %v2224, 1e-05
        %v2289 = vadd.f32 %v2225, 1e-05
        %v2290 = vadd.f32 %v2226, 1e-05
        %v2291 = vadd.f32 %v2227, 1e-05
        %v2292 = vadd.f32 %v2228, 1e-05
        %v2293 = vrsqrt.pop %v2261
        %v2294 = vrsqrt.pop %v2262
        %v2295 = vrsqrt.pop %v2263
        %v2296 = vrsqrt.pop %v2264
        %v2297 = vrsqrt.pop %v2265
        %v2298 = vrsqrt.pop %v2266
        %v2299 = vrsqrt.pop %v2267
        %v2300 = vrsqrt.pop %v2268
        %v2301 = vrsqrt.pop %v2269
        %v2302 = vrsqrt.pop %v2270
        %v2303 = vrsqrt.pop %v2271
        %v2304 = vrsqrt.pop %v2272
        %v2305 = vrsqrt.pop %v2273
        %v2306 = vrsqrt.pop %v2274
        %v2307 = vrsqrt.pop %v2275
        %v2308 = vrsqrt.pop %v2276
        %v2309 = vrsqrt.pop %v2277
        %v2310 = vrsqrt.pop %v2278
        %v2311 = vrsqrt.pop %v2279
        %v2312 = vrsqrt.pop %v2280
        %v2313 = vrsqrt.pop %v2281
        %v2314 = vrsqrt.pop %v2282
        %v2315 = vrsqrt.pop %v2283
        %v2316 = vrsqrt.pop %v2284
        %v2317 = vrsqrt.pop %v2285
        %v2318 = vrsqrt.pop %v2286
        %v2319 = vrsqrt.pop %v2287
        %v2320 = vrsqrt.pop %v2288
        %v2321 = vrsqrt.pop %v2289
        %v2322 = vrsqrt.pop %v2290
        %v2323 = vrsqrt.pop %v2291
        %v2324 = vrsqrt.pop %v2292
        %v2325 = vmul.f32 %v2229, %v2293
        %v2326 = vmul.f32 %v2230, %v2294
        %v2327 = vmul.f32 %v2231, %v2295
        %v2328 = vmul.f32 %v2232, %v2296
        %v2329 = vmul.f32 %v2233, %v2297
        %v2330 = vmul.f32 %v2234, %v2298
        %v2331 = vmul.f32 %v2235, %v2299
        %v2332 = vmul.f32 %v2236, %v2300
        %v2333 = vmul.f32 %v2237, %v2301
        %v2334 = vmul.f32 %v2238, %v2302
        %v2335 = vmul.f32 %v2239, %v2303
        %v2336 = vmul.f32 %v2240, %v2304
        %v2337 = vmul.f32 %v2241, %v2305
        %v2338 = vmul.f32 %v2242, %v2306
        %v2339 = vmul.f32 %v2243, %v2307
        %v2340 = vmul.f32 %v2244, %v2308
        %v2341 = vmul.f32 %v2245, %v2309
        %v2342 = vmul.f32 %v2246, %v2310
        %v2343 = vmul.f32 %v2247, %v2311
        %v2344 = vmul.f32 %v2248, %v2312
        %v2345 = vmul.f32 %v2249, %v2313
        %v2346 = vmul.f32 %v2250, %v2314
        %v2347 = vmul.f32 %v2251, %v2315
        %v2348 = vmul.f32 %v2252, %v2316
        %v2349 = vmul.f32 %v2253, %v2317
        %v2350 = vmul.f32 %v2254, %v2318
        %v2351 = vmul.f32 %v2255, %v2319
        %v2352 = vmul.f32 %v2256, %v2320
        %v2353 = vmul.f32 %v2257, %v2321
        %v2354 = vmul.f32 %v2258, %v2322
        %v2355 = vmul.f32 %v2259, %v2323
        %v2356 = vmul.f32 %v2260, %v2324
        %v2357 = vld [vmem:[%s7] sm:$0x1]
        %v2359 = vlaneseq
        %v2360 = vshrl.u32 %v2359, 7
        %v2361 = vsub.s32 0, %v2360
        %v2362 = vrot.slane %v2357, %v2361
        %v2364 = vmul.f32 %v2325, %v2362
        %v2365 = vmul.f32 %v2326, %v2362
        %v2366 = vmul.f32 %v2327, %v2362
        %v2367 = vmul.f32 %v2328, %v2362
        %v2368 = vmul.f32 %v2329, %v2362
        %v2369 = vmul.f32 %v2330, %v2362
        %v2370 = vmul.f32 %v2331, %v2362
        %v2371 = vmul.f32 %v2332, %v2362
        %v2372 = vmul.f32 %v2333, %v2362
        %v2373 = vmul.f32 %v2334, %v2362
        %v2374 = vmul.f32 %v2335, %v2362
        %v2375 = vmul.f32 %v2336, %v2362
        %v2376 = vmul.f32 %v2337, %v2362
        %v2377 = vmul.f32 %v2338, %v2362
        %v2378 = vmul.f32 %v2339, %v2362
        %v2379 = vmul.f32 %v2340, %v2362
        %v2380 = vmul.f32 %v2341, %v2362
        %v2381 = vmul.f32 %v2342, %v2362
        %v2382 = vmul.f32 %v2343, %v2362
        %v2383 = vmul.f32 %v2344, %v2362
        %v2384 = vmul.f32 %v2345, %v2362
        %v2385 = vmul.f32 %v2346, %v2362
        %v2386 = vmul.f32 %v2347, %v2362
        %v2387 = vmul.f32 %v2348, %v2362
        %v2388 = vmul.f32 %v2349, %v2362
        %v2389 = vmul.f32 %v2350, %v2362
        %v2390 = vmul.f32 %v2351, %v2362
        %v2391 = vmul.f32 %v2352, %v2362
        %v2392 = vmul.f32 %v2353, %v2362
        %v2393 = vmul.f32 %v2354, %v2362
        %v2394 = vmul.f32 %v2355, %v2362
        %v2395 = vmul.f32 %v2356, %v2362
        %v2396 = vld [vmem:[%s8] sm:$0x1]
        %v2398 = vlaneseq
        %v2399 = vshrl.u32 %v2398, 7
        %v2400 = vsub.s32 0, %v2399
        %v2401 = vrot.slane %v2396, %v2400
        %v2403 = vadd.f32 %v2364, %v2401
        %v2404 = vadd.f32 %v2365, %v2401
        %v2405 = vadd.f32 %v2366, %v2401
        %v2406 = vadd.f32 %v2367, %v2401
        %v2407 = vadd.f32 %v2368, %v2401
        %v2408 = vadd.f32 %v2369, %v2401
        %v2409 = vadd.f32 %v2370, %v2401
        %v2410 = vadd.f32 %v2371, %v2401
        %v2411 = vadd.f32 %v2372, %v2401
        %v2412 = vadd.f32 %v2373, %v2401
        %v2413 = vadd.f32 %v2374, %v2401
        %v2414 = vadd.f32 %v2375, %v2401
        %v2415 = vadd.f32 %v2376, %v2401
        %v2416 = vadd.f32 %v2377, %v2401
        %v2417 = vadd.f32 %v2378, %v2401
        %v2418 = vadd.f32 %v2379, %v2401
        %v2419 = vadd.f32 %v2380, %v2401
        %v2420 = vadd.f32 %v2381, %v2401
        %v2421 = vadd.f32 %v2382, %v2401
        %v2422 = vadd.f32 %v2383, %v2401
        %v2423 = vadd.f32 %v2384, %v2401
        %v2424 = vadd.f32 %v2385, %v2401
        %v2425 = vadd.f32 %v2386, %v2401
        %v2426 = vadd.f32 %v2387, %v2401
        %v2427 = vadd.f32 %v2388, %v2401
        %v2428 = vadd.f32 %v2389, %v2401
        %v2429 = vadd.f32 %v2390, %v2401
        %v2430 = vadd.f32 %v2391, %v2401
        %v2431 = vadd.f32 %v2392, %v2401
        %v2432 = vadd.f32 %v2393, %v2401
        %v2433 = vadd.f32 %v2394, %v2401
        %v2434 = vadd.f32 %v2395, %v2401
        %2435 = vst [vmem:[%s328] sm:$0xff] %v2403
        %2436 = vst [vmem:[%s328 + $0x8] sm:$0xff] %v2404
        %2437 = vst [vmem:[%s328 + $0x10] sm:$0xff] %v2405
        %2438 = vst [vmem:[%s328 + $0x18] sm:$0xff] %v2406
        %2439 = vst [vmem:[%s328 + $0x20] sm:$0xff] %v2407
        %2440 = vst [vmem:[%s328 + $0x28] sm:$0xff] %v2408
        %2441 = vst [vmem:[%s328 + $0x30] sm:$0xff] %v2409
        %2442 = vst [vmem:[%s328 + $0x38] sm:$0xff] %v2410
        %2443 = vst [vmem:[%s328 + $0x40] sm:$0xff] %v2411
        %2444 = vst [vmem:[%s328 + $0x48] sm:$0xff] %v2412
        %2445 = vst [vmem:[%s328 + $0x50] sm:$0xff] %v2413
        %2446 = vst [vmem:[%s328 + $0x58] sm:$0xff] %v2414
        %2447 = vst [vmem:[%s328 + $0x60] sm:$0xff] %v2415
        %2448 = vst [vmem:[%s328 + $0x68] sm:$0xff] %v2416
        %2449 = vst [vmem:[%s328 + $0x70] sm:$0xff] %v2417
        %2450 = vst [vmem:[%s328 + $0x78] sm:$0xff] %v2418
        %2451 = vst [vmem:[%s328 + $0x80] sm:$0xff] %v2419
        %2452 = vst [vmem:[%s328 + $0x88] sm:$0xff] %v2420
        %2453 = vst [vmem:[%s328 + $0x90] sm:$0xff] %v2421
        %2454 = vst [vmem:[%s328 + $0x98] sm:$0xff] %v2422
        %2455 = vst [vmem:[%s328 + $0xa0] sm:$0xff] %v2423
        %2456 = vst [vmem:[%s328 + $0xa8] sm:$0xff] %v2424
        %2457 = vst [vmem:[%s328 + $0xb0] sm:$0xff] %v2425
        %2458 = vst [vmem:[%s328 + $0xb8] sm:$0xff] %v2426
        %2459 = vst [vmem:[%s328 + $0xc0] sm:$0xff] %v2427
        %2460 = vst [vmem:[%s328 + $0xc8] sm:$0xff] %v2428
        %2461 = vst [vmem:[%s328 + $0xd0] sm:$0xff] %v2429
        %2462 = vst [vmem:[%s328 + $0xd8] sm:$0xff] %v2430
        %2463 = vst [vmem:[%s328 + $0xe0] sm:$0xff] %v2431
        %2464 = vst [vmem:[%s328 + $0xe8] sm:$0xff] %v2432
        %2465 = vst [vmem:[%s328 + $0xf0] sm:$0xff] %v2433
        %2466 = vst [vmem:[%s328 + $0xf8] sm:$0xff] %v2434
        %s2467 = sand.u32 %s225, 1
        %s2468 = scalar_lea.sflag [#allocation3], %s2467
        %s2469 = sand.u32 %s225, 1
        %s2470 = smul.addr %s2469, 256
        %s2471 = scalar_lea.vmem [#allocation2], %s2470
        // Predicated region
        $region57: #{custom_projection_head.1} parent=55 // pred_check
          %p2472 = pneg %p235
        $region58: #{custom_projection_head.1} parent=55 // pred_check_branch
          %2474 = sbr.rel (%p2472) target = $region60
        $region59: #{custom_projection_head.1} parent=55 // pred_region
          %s2475 = smul.u32 32, %s23
          %s2477 = ssub.s32 4096, 4096
          %2478 = vsyncadd %s2468, %s2477
          %s2479 = smul.addr %s2475, 128
          %s2480 = scalar_lea.hbm %s9, %s2479
          %s2481 = sshll.u32 %s2471, 4
          %s2482 = int_to_ptr.vmem [resolvable:$true] %s2481
          %2487 = dma.vmem_to_hbm [thread:$0]  %s2482, 4096, %s2480, %s2468, 128, 128, 8
        $region60: #{custom_projection_head.1} parent=55 // pred_fallthru
          _
      $region56: #{custom_projection_head.1} parent=5 // pred_fallthru
        _
      %p2488 = scmp.le.s32.totalorder 2, %s18
      // Predicated region
      $region61: #{custom_projection_head.1} parent=5 // pred_check
        %p2489 = pneg %p2488
      $region62: #{custom_projection_head.1} parent=5 // pred_check_branch
        %2491 = sbr.rel (%p2489) target = $region64
      $region63: #{custom_projection_head.1} parent=5 // pred_region
        %s2492 = ssub.s32 %s18, 2
        // Predicated region
        $region65: #{custom_projection_head.1} parent=63 // pred_check
          %p2493 = pneg %p241
        $region66: #{custom_projection_head.1} parent=63 // pred_check_branch
          %2495 = sbr.rel (%p2493) target = $region68
        $region67: #{custom_projection_head.1} parent=63 // pred_region
          %s2496 = sand.u32 %s226, 1
          %s2497 = scalar_lea.sflag [#allocation3], %s2496
          %s2498 = sand.u32 %s226, 1
          %s2499 = smul.addr %s2498, 256
          %s2500 = scalar_lea.vmem [#allocation2], %s2499
          %2501 = dma.done %s2497, 4096
        $region68: #{custom_projection_head.1} parent=63 // pred_fallthru
          _
      $region64: #{custom_projection_head.1} parent=5 // pred_fallthru
        _
    $region6: #{custom_projection_head.1} parent=1 // loop_footer
      %s22 = sadd.s32 1, %s18
    $region7: #{custom_projection_head.1} parent=1 // loop_footer_branch
      %17 = sbr.rel target = $region3
    $region8: #{custom_projection_head.1} parent=1 // loop_exit
      _
    %2502 = vsyncpa [#allocation3], 1
    %s2503 = scalar_lea.sflag [#allocation3], 1
    %2504 = vsyncpa %s2503, 1

</llo_original>
